<compile_context>
chip_gen: v7x
topology: tpu7x:2x2x1
jax: 0.10.0
libtpu: 0.0.40
codegen_flags: <defaults>
</compile_context>

<pallas_src>
import jax
import jax.numpy as jnp
import numpy as np
from jax.experimental import pallas as pl
from jax.experimental.pallas import tpu as pltpu


def _make_kernel(*, C, L, K, TB):
    pad = (K - 1) // 2
    N = TB * L

    def kernel(x_ref, w1_ref, b1_ref, w2_ref, b2_ref,
               wf1_ref, bf1_ref, wf2_ref, bf2_ref,
               pool_ref, exp_ref, o_ref):
        x = x_ref[...].astype(jnp.float32)                      # (C, N): TB samples on lanes

        # Position of each lane inside its sample (static pattern).
        pos = jax.lax.broadcasted_iota(jnp.int32, (1, N), 1) % L   # (1, N)

        def shifted(v, delta):
            # s[:, n] = v[:, n + delta] if still inside the same sample, else 0.
            if delta == 0:
                return v
            s = pltpu.roll(v, (-delta) % N, axis=1)             # lane rotate on the XLU
            if delta < 0:
                return jnp.where(pos >= -delta, s, 0.0)
            return jnp.where(pos < L - delta, s, 0.0)

        def conv_bn_relu(v, w_ref, b_ref):
            # Stack the K shifted views -> one (C, K*C) @ (K*C, N) MXU matmul.
            xs = jnp.concatenate([shifted(v, t - pad) for t in range(K)], axis=0)
            y = jnp.dot(w_ref[...].astype(jnp.float32), xs,
                        preferred_element_type=jnp.float32)
            return jnp.maximum(y + b_ref[...], 0.0)             # BN scale already in weights

        y1 = conv_bn_relu(x, w1_ref, b1_ref)
        y2 = conv_bn_relu(y1, w2_ref, b2_ref)

        # --- SE block, vectorized over the TB samples of this tile ---
        # Per-sample global average pool via matmul: (C, N) @ (N, TB) -> (C, TB).
        m = jnp.dot(y2, pool_ref[...], preferred_element_type=jnp.float32)
        h = jnp.maximum(
            jnp.dot(wf1_ref[...], m, preferred_element_type=jnp.float32) + bf1_ref[...],
            0.0)                                                 # (Cr, TB)
        g = jax.nn.sigmoid(
            jnp.dot(wf2_ref[...], h, preferred_element_type=jnp.float32) + bf2_ref[...])
        # Broadcast gates back to every lane of their sample: (C, TB) @ (TB, N).
        gate = jnp.dot(g, exp_ref[...], preferred_element_type=jnp.float32)  # (C, N)

        # Residual add + channel gate, single lane-dense store.
        o_ref[...] = (x + y2 * gate).astype(o_ref.dtype)

    return kernel


def _pick_tb(B, L, lane_target=1024):
    """Samples per grid step (lane extent = TB*L).

    Prefers >=2 grid steps (two v7x TensorCores) and a lane extent of roughly
    `lane_target` (wide unmasked stores, amortized per-step overhead)."""
    best, best_key = 1, None
    for t in range(1, B + 1):
        if B % t:
            continue
        if (t * L) % 128 and t != B:       # lane tile must be 128-aligned or full
            continue
        key = ((B // t >= 2) or B == 1,    # keep both v7x TensorCores busy
               t * L <= max(lane_target, L),
               t)
        if best_key is None or key > best_key:
            best, best_key = t, key
    return best


def resblock_forward(x, params, *, block_batch=None):
    B, C, L = x.shape
    (w1, b1, w2, b2, wf1, bf1, wf2, bf2) = params
    assert w1.shape[0] == C and w1.shape[1] % C == 0
    K = w1.shape[1] // C
    assert K % 2 == 1, "'same' padding path requires an odd kernel size"

    TB = block_batch if block_batch is not None else _pick_tb(B, L)
    assert B % TB == 0
    N = TB * L
    assert N % 128 == 0 or TB == B, "lane tile must be a multiple of 128 (or whole batch)"

    # Channel-major slab: samples laid side by side along the lane axis.
    xf = jnp.transpose(x, (1, 0, 2)).reshape(C, B * L)

    # Constant SE pooling / broadcast matrices (built once in the wrapper).
    sample = jnp.arange(N, dtype=jnp.int32) // L                       # (N,)
    pool = (sample[:, None] == jnp.arange(TB)[None, :]).astype(jnp.float32) / L   # (N, TB)
    expand = (jnp.arange(TB)[:, None] == sample[None, :]).astype(jnp.float32)     # (TB, N)

    def full(shape):
        n = len(shape)
        return pl.BlockSpec(shape, lambda i, _n=n: (0,) * _n)

    of = pl.pallas_call(
        _make_kernel(C=C, L=L, K=K, TB=TB),
        out_shape=jax.ShapeDtypeStruct((C, B * L), x.dtype),
        grid=(B // TB,),
        in_specs=[
            pl.BlockSpec((C, N), lambda i: (0, i)),
            full(w1.shape), full(b1.shape),
            full(w2.shape), full(b2.shape),
            full(wf1.shape), full(bf1.shape),
            full(wf2.shape), full(bf2.shape),
            full(pool.shape), full(expand.shape),
        ],
        out_specs=pl.BlockSpec((C, N), lambda i: (0, i)),
        compiler_params=pltpu.CompilerParams(
            dimension_semantics=("parallel",)),
    )(xf, w1, b1, w2, b2, wf1, bf1, wf2, bf2, pool, expand)

    return jnp.transpose(of.reshape(C, B, L), (1, 0, 2))


def make_params(key, C, K, se_ratio):
    """Deterministic synthetic parameters; conv bias + eval-mode BN folded so that
    the per-channel scale lives inside the stacked conv weight and only a bias
    remains."""
    assert K % 2 == 1, "this kernel implements 'same' padding for odd kernel sizes"
    Cr = max(1, C // se_ratio)
    eps = 1e-5
    ks = jax.random.split(key, 16)

    def nrm(k, shape, scale):
        return (scale * jax.random.normal(k, shape)).astype(jnp.float32)

    def fold_branch(kw, kb, kg, kbeta, km, kv):
        w = nrm(kw, (C, C, K), 0.2)                     # PyTorch conv weight (Co, Ci, K)
        cb = nrm(kb, (C,), 0.1)                         # conv bias
        gamma = (1.0 + 0.1 * jax.random.normal(kg, (C,))).astype(jnp.float32)
        beta = nrm(kbeta, (C,), 0.1)
        mean = nrm(km, (C,), 0.1)
        var = (0.5 + jax.random.uniform(kv, (C,))).astype(jnp.float32)
        scale = gamma / jnp.sqrt(var + eps)
        bias = beta + scale * (cb - mean)
        # Stacked, BN-scaled weight: w_stk[co, t*C + ci] = scale[co] * w[co, ci, t]
        w_stk = (scale[:, None, None] * jnp.transpose(w, (0, 2, 1))).reshape(C, K * C)
        return w_stk.astype(jnp.float32), bias[:, None].astype(jnp.float32)

    w1, b1 = fold_branch(*ks[0:6])
    w2, b2 = fold_branch(*ks[6:12])

    wf1 = nrm(ks[12], (Cr, C), 0.3)                     # Linear(C -> C // se_ratio)
    bf1 = nrm(ks[13], (Cr,), 0.1)[:, None]
    wf2 = nrm(ks[14], (C, Cr), 0.3)                     # Linear(C // se_ratio -> C)
    bf2 = nrm(ks[15], (C,), 0.1)[:, None]

    return (w1, b1, w2, b2, wf1, bf1, wf2, bf2)


def ref_forward(x, params):
    """Plain-JAX reference using the same folded parameters (pad-based conv)."""
    (w1, b1, w2, b2, wf1, bf1, wf2, bf2) = params
    B, C, L = x.shape
    K = w1.shape[1] // C
    pad = (K - 1) // 2

    def conv_bn_relu(inp, ws, bias):
        xp = jnp.pad(inp, ((0, 0), (0, 0), (pad, pad)))
        acc = 0.0
        for t in range(K):
            wt = ws[:, t * C:(t + 1) * C]
            acc = acc + jnp.einsum('oc,bcl->bol', wt, xp[:, :, t:t + L])
        return jnp.maximum(acc + bias[None, :, :], 0.0)

    y1 = conv_bn_relu(x, w1, b1)
    y2 = conv_bn_relu(y1, w2, b2)
    sq = jnp.mean(y2, axis=2)                                    # (B, C)
    h = jnp.maximum(sq @ wf1.T + bf1[:, 0], 0.0)                 # (B, Cr)
    g = jax.nn.sigmoid(h @ wf2.T + bf2[:, 0])                    # (B, C)
    return x + y2 * g[:, :, None]


if __name__ == "__main__":
    B, C, L, K, se_ratio = 8, 8, 128, 3, 4
    key = jax.random.PRNGKey(0)
    kx, kp = jax.random.split(key)
    x = jax.random.normal(kx, (B, C, L), dtype=jnp.float32)
    params = make_params(kp, C, K, se_ratio)

    out = jax.block_until_ready(resblock_forward(x, params))
    ref = ref_forward(x, params)

    assert out.shape == (B, C, L)
    np.testing.assert_allclose(np.asarray(out), np.asarray(ref), rtol=1e-3, atol=1e-3)
    print("KERNEL_OK")
</pallas_src>

<mosaic_0001>
module attributes {stable_mosaic.version = 11 : i64} {
  func.func @kernel(%arg0: i32, %arg1: memref<8x512xf32, #tpu.memory_space<vmem>>, %arg2: memref<8x24xf32, #tpu.memory_space<vmem>>, %arg3: memref<8x1xf32, #tpu.memory_space<vmem>>, %arg4: memref<8x24xf32, #tpu.memory_space<vmem>>, %arg5: memref<8x1xf32, #tpu.memory_space<vmem>>, %arg6: memref<2x8xf32, #tpu.memory_space<vmem>>, %arg7: memref<2x1xf32, #tpu.memory_space<vmem>>, %arg8: memref<8x2xf32, #tpu.memory_space<vmem>>, %arg9: memref<8x1xf32, #tpu.memory_space<vmem>>, %arg10: memref<512x4xf32, #tpu.memory_space<vmem>>, %arg11: memref<4x512xf32, #tpu.memory_space<vmem>>, %arg12: memref<8x512xf32, #tpu.memory_space<vmem>>) attributes {dimension_semantics = [#tpu.dimension_semantics<parallel>], iteration_bounds = array<i64: 2>, scalar_prefetch = 0 : i64, scratch_operands = 0 : i64, tpu.core_type = #tpu.core_type<tc>, window_params = [{transform_indices = @transform_0, window_bounds = array<i64: 8, 512>}, {pipeline_mode = #tpu.pipeline_mode<synchronous>, transform_indices = @transform_1, window_bounds = array<i64: 8, 24>}, {pipeline_mode = #tpu.pipeline_mode<synchronous>, transform_indices = @transform_2, window_bounds = array<i64: 8, 1>}, {pipeline_mode = #tpu.pipeline_mode<synchronous>, transform_indices = @transform_3, window_bounds = array<i64: 8, 24>}, {pipeline_mode = #tpu.pipeline_mode<synchronous>, transform_indices = @transform_4, window_bounds = array<i64: 8, 1>}, {pipeline_mode = #tpu.pipeline_mode<synchronous>, transform_indices = @transform_5, window_bounds = array<i64: 2, 8>}, {pipeline_mode = #tpu.pipeline_mode<synchronous>, transform_indices = @transform_6, window_bounds = array<i64: 2, 1>}, {pipeline_mode = #tpu.pipeline_mode<synchronous>, transform_indices = @transform_7, window_bounds = array<i64: 8, 2>}, {pipeline_mode = #tpu.pipeline_mode<synchronous>, transform_indices = @transform_8, window_bounds = array<i64: 8, 1>}, {pipeline_mode = #tpu.pipeline_mode<synchronous>, transform_indices = @transform_9, window_bounds = array<i64: 512, 4>}, {pipeline_mode = #tpu.pipeline_mode<synchronous>, transform_indices = @transform_10, window_bounds = array<i64: 4, 512>}, {transform_indices = @transform_11, window_bounds = array<i64: 8, 512>}]} {
    %c0 = arith.constant 0 : index
    %c0_0 = arith.constant 0 : index
    %0 = vector.load %arg1[%c0, %c0_0] : memref<8x512xf32, #tpu.memory_space<vmem>>, vector<8x512xf32>
    %1 = tpu.iota {dimensions = array<i32: 1>} : vector<1x512xi32>
    %c128_i32 = arith.constant 128 : i32
    %c0_i32 = arith.constant 0 : i32
    %2 = arith.cmpi eq, %c128_i32, %c0_i32 : i32
    %c1_i32 = arith.constant 1 : i32
    %3 = arith.select %2, %c1_i32, %c128_i32 : i32
    %4 = vector.broadcast %3 : i32 to vector<1x512xi32>
    %5 = arith.remsi %1, %4 : vector<1x512xi32>
    %c0_i32_1 = arith.constant 0 : i32
    %6 = vector.broadcast %c0_i32_1 : i32 to vector<1x512xi32>
    %7 = arith.cmpi ne, %5, %6 : vector<1x512xi32>
    %c0_i32_2 = arith.constant 0 : i32
    %8 = vector.broadcast %c0_i32_2 : i32 to vector<1x512xi32>
    %9 = arith.cmpi slt, %5, %8 : vector<1x512xi32>
    %c0_i32_3 = arith.constant 0 : i32
    %10 = arith.cmpi slt, %3, %c0_i32_3 : i32
    %11 = vector.broadcast %10 : i1 to vector<1x512xi1>
    %12 = vector.broadcast %11 : vector<1x512xi1> to vector<1x512xi1>
    %13 = arith.xori %9, %12 : vector<1x512xi1>
    %14 = arith.andi %13, %7 : vector<1x512xi1>
    %15 = vector.broadcast %3 : i32 to vector<1x512xi32>
    %16 = arith.addi %5, %15 : vector<1x512xi32>
    %17 = arith.select %14, %16, %5 : vector<1x512xi1>, vector<1x512xi32>
    %c1_i32_4 = arith.constant 1 : i32
    %18 = tpu.dynamic_rotate %0 by %c1_i32_4 dim 1 : vector<8x512xf32>, i32 -> vector<8x512xf32>
    %c1_i32_5 = arith.constant 1 : i32
    %19 = vector.broadcast %c1_i32_5 : i32 to vector<1x512xi32>
    %20 = arith.cmpi sge, %17, %19 : vector<1x512xi32>
    %cst = arith.constant 0.000000e+00 : f32
    %21 = vector.shape_cast %20 : vector<1x512xi1> to vector<1x512xi1>
    %22 = vector.broadcast %21 : vector<1x512xi1> to vector<8x512xi1>
    %23 = vector.broadcast %cst : f32 to vector<8x512xf32>
    %24 = arith.select %22, %18, %23 : vector<8x512xi1>, vector<8x512xf32>
    %c511_i32 = arith.constant 511 : i32
    %25 = tpu.dynamic_rotate %0 by %c511_i32 dim 1 : vector<8x512xf32>, i32 -> vector<8x512xf32>
    %c127_i32 = arith.constant 127 : i32
    %26 = vector.broadcast %c127_i32 : i32 to vector<1x512xi32>
    %27 = arith.cmpi slt, %17, %26 : vector<1x512xi32>
    %cst_6 = arith.constant 0.000000e+00 : f32
    %28 = vector.shape_cast %27 : vector<1x512xi1> to vector<1x512xi1>
    %29 = vector.broadcast %28 : vector<1x512xi1> to vector<8x512xi1>
    %30 = vector.broadcast %cst_6 : f32 to vector<8x512xf32>
    %31 = arith.select %29, %25, %30 : vector<8x512xi1>, vector<8x512xf32>
    %32 = tpu.concatenate %24, %0, %31 in 0 : vector<8x512xf32>, vector<8x512xf32>, vector<8x512xf32> -> vector<24x512xf32>
    %c0_7 = arith.constant 0 : index
    %c0_8 = arith.constant 0 : index
    %33 = vector.load %arg2[%c0_7, %c0_8] : memref<8x24xf32, #tpu.memory_space<vmem>>, vector<8x24xf32>
    %cst_9 = arith.constant dense<0.000000e+00> : vector<8x512xf32>
    %34 = tpu.matmul %33, %32, %cst_9 {dimension_numbers = #tpu.dot_dimension_numbers<[1], [0], [0], [1], [0, 0, 1, 1], [], []>} : vector<8x24xf32>, vector<24x512xf32>, vector<8x512xf32> -> vector<8x512xf32>
    %c0_10 = arith.constant 0 : index
    %c0_11 = arith.constant 0 : index
    %35 = vector.load %arg3[%c0_10, %c0_11] : memref<8x1xf32, #tpu.memory_space<vmem>>, vector<8x1xf32>
    %36 = vector.broadcast %35 : vector<8x1xf32> to vector<8x512xf32>
    %37 = arith.addf %34, %36 : vector<8x512xf32>
    %cst_12 = arith.constant 0.000000e+00 : f32
    %38 = vector.broadcast %cst_12 : f32 to vector<8x512xf32>
    %39 = arith.maximumf %37, %38 : vector<8x512xf32>
    %c1_i32_13 = arith.constant 1 : i32
    %40 = tpu.dynamic_rotate %39 by %c1_i32_13 dim 1 : vector<8x512xf32>, i32 -> vector<8x512xf32>
    %c1_i32_14 = arith.constant 1 : i32
    %41 = vector.broadcast %c1_i32_14 : i32 to vector<1x512xi32>
    %42 = arith.cmpi sge, %17, %41 : vector<1x512xi32>
    %cst_15 = arith.constant 0.000000e+00 : f32
    %43 = vector.shape_cast %42 : vector<1x512xi1> to vector<1x512xi1>
    %44 = vector.broadcast %43 : vector<1x512xi1> to vector<8x512xi1>
    %45 = vector.broadcast %cst_15 : f32 to vector<8x512xf32>
    %46 = arith.select %44, %40, %45 : vector<8x512xi1>, vector<8x512xf32>
    %c511_i32_16 = arith.constant 511 : i32
    %47 = tpu.dynamic_rotate %39 by %c511_i32_16 dim 1 : vector<8x512xf32>, i32 -> vector<8x512xf32>
    %c127_i32_17 = arith.constant 127 : i32
    %48 = vector.broadcast %c127_i32_17 : i32 to vector<1x512xi32>
    %49 = arith.cmpi slt, %17, %48 : vector<1x512xi32>
    %cst_18 = arith.constant 0.000000e+00 : f32
    %50 = vector.shape_cast %49 : vector<1x512xi1> to vector<1x512xi1>
    %51 = vector.broadcast %50 : vector<1x512xi1> to vector<8x512xi1>
    %52 = vector.broadcast %cst_18 : f32 to vector<8x512xf32>
    %53 = arith.select %51, %47, %52 : vector<8x512xi1>, vector<8x512xf32>
    %54 = tpu.concatenate %46, %39, %53 in 0 : vector<8x512xf32>, vector<8x512xf32>, vector<8x512xf32> -> vector<24x512xf32>
    %c0_19 = arith.constant 0 : index
    %c0_20 = arith.constant 0 : index
    %55 = vector.load %arg4[%c0_19, %c0_20] : memref<8x24xf32, #tpu.memory_space<vmem>>, vector<8x24xf32>
    %cst_21 = arith.constant dense<0.000000e+00> : vector<8x512xf32>
    %56 = tpu.matmul %55, %54, %cst_21 {dimension_numbers = #tpu.dot_dimension_numbers<[1], [0], [0], [1], [0, 0, 1, 1], [], []>} : vector<8x24xf32>, vector<24x512xf32>, vector<8x512xf32> -> vector<8x512xf32>
    %c0_22 = arith.constant 0 : index
    %c0_23 = arith.constant 0 : index
    %57 = vector.load %arg5[%c0_22, %c0_23] : memref<8x1xf32, #tpu.memory_space<vmem>>, vector<8x1xf32>
    %58 = vector.broadcast %57 : vector<8x1xf32> to vector<8x512xf32>
    %59 = arith.addf %56, %58 : vector<8x512xf32>
    %cst_24 = arith.constant 0.000000e+00 : f32
    %60 = vector.broadcast %cst_24 : f32 to vector<8x512xf32>
    %61 = arith.maximumf %59, %60 : vector<8x512xf32>
    %c0_25 = arith.constant 0 : index
    %c0_26 = arith.constant 0 : index
    %62 = vector.load %arg10[%c0_25, %c0_26] : memref<512x4xf32, #tpu.memory_space<vmem>>, vector<512x4xf32>
    %cst_27 = arith.constant dense<0.000000e+00> : vector<8x4xf32>
    %63 = tpu.matmul %61, %62, %cst_27 {dimension_numbers = #tpu.dot_dimension_numbers<[1], [0], [0], [1], [0, 0, 1, 1], [], []>} : vector<8x512xf32>, vector<512x4xf32>, vector<8x4xf32> -> vector<8x4xf32>
    %c0_28 = arith.constant 0 : index
    %c0_29 = arith.constant 0 : index
    %64 = vector.load %arg6[%c0_28, %c0_29] : memref<2x8xf32, #tpu.memory_space<vmem>>, vector<2x8xf32>
    %cst_30 = arith.constant dense<0.000000e+00> : vector<2x4xf32>
    %65 = tpu.matmul %64, %63, %cst_30 {dimension_numbers = #tpu.dot_dimension_numbers<[1], [0], [0], [1], [0, 0, 1, 1], [], []>} : vector<2x8xf32>, vector<8x4xf32>, vector<2x4xf32> -> vector<2x4xf32>
    %c0_31 = arith.constant 0 : index
    %c0_32 = arith.constant 0 : index
    %66 = vector.load %arg7[%c0_31, %c0_32] : memref<2x1xf32, #tpu.memory_space<vmem>>, vector<2x1xf32>
    %67 = vector.broadcast %66 : vector<2x1xf32> to vector<2x4xf32>
    %68 = arith.addf %65, %67 : vector<2x4xf32>
    %cst_33 = arith.constant 0.000000e+00 : f32
    %69 = vector.broadcast %cst_33 : f32 to vector<2x4xf32>
    %70 = arith.maximumf %68, %69 : vector<2x4xf32>
    %c0_34 = arith.constant 0 : index
    %c0_35 = arith.constant 0 : index
    %71 = vector.load %arg8[%c0_34, %c0_35] : memref<8x2xf32, #tpu.memory_space<vmem>>, vector<8x2xf32>
    %cst_36 = arith.constant dense<0.000000e+00> : vector<8x4xf32>
    %72 = tpu.matmul %71, %70, %cst_36 {dimension_numbers = #tpu.dot_dimension_numbers<[1], [0], [0], [1], [0, 0, 1, 1], [], []>} : vector<8x2xf32>, vector<2x4xf32>, vector<8x4xf32> -> vector<8x4xf32>
    %c0_37 = arith.constant 0 : index
    %c0_38 = arith.constant 0 : index
    %73 = vector.load %arg9[%c0_37, %c0_38] : memref<8x1xf32, #tpu.memory_space<vmem>>, vector<8x1xf32>
    %74 = vector.broadcast %73 : vector<8x1xf32> to vector<8x4xf32>
    %75 = arith.addf %72, %74 : vector<8x4xf32>
    %76 = arith.negf %75 : vector<8x4xf32>
    %77 = math.exp %76 : vector<8x4xf32>
    %cst_39 = arith.constant 1.000000e+00 : f32
    %78 = vector.broadcast %cst_39 : f32 to vector<8x4xf32>
    %79 = arith.addf %78, %77 : vector<8x4xf32>
    %80 = arith.divf %78, %79 : vector<8x4xf32>
    %c0_40 = arith.constant 0 : index
    %c0_41 = arith.constant 0 : index
    %81 = vector.load %arg11[%c0_40, %c0_41] : memref<4x512xf32, #tpu.memory_space<vmem>>, vector<4x512xf32>
    %cst_42 = arith.constant dense<0.000000e+00> : vector<8x512xf32>
    %82 = tpu.matmul %80, %81, %cst_42 {dimension_numbers = #tpu.dot_dimension_numbers<[1], [0], [0], [1], [0, 0, 1, 1], [], []>} : vector<8x4xf32>, vector<4x512xf32>, vector<8x512xf32> -> vector<8x512xf32>
    %83 = arith.mulf %61, %82 : vector<8x512xf32>
    %84 = arith.addf %0, %83 : vector<8x512xf32>
    %c0_43 = arith.constant 0 : index
    %c0_44 = arith.constant 0 : index
    %85 = vector.load %arg12[%c0_43, %c0_44] : memref<8x512xf32, #tpu.memory_space<vmem>>, vector<8x512xf32>
    tpu.vector_store %arg12[%c0_43, %c0_44], %84 {strides = array<i32>} : memref<8x512xf32, #tpu.memory_space<vmem>>, vector<8x512xf32>,
    return
  }
  func.func @transform_0(%arg0: i32) -> (i32, i32) {
    %c0_i32 = arith.constant 0 : i32
    %c0_i32_0 = arith.constant 0 : i32
    return %c0_i32, %arg0 : i32, i32
  }
  func.func @transform_1(%arg0: i32) -> (i32, i32) {
    %c0_i32 = arith.constant 0 : i32
    %c0_i32_0 = arith.constant 0 : i32
    %c0_i32_1 = arith.constant 0 : i32
    return %c0_i32, %c0_i32_0 : i32, i32
  }
  func.func @transform_2(%arg0: i32) -> (i32, i32) {
    %c0_i32 = arith.constant 0 : i32
    %c0_i32_0 = arith.constant 0 : i32
    %c0_i32_1 = arith.constant 0 : i32
    return %c0_i32, %c0_i32_0 : i32, i32
  }
  func.func @transform_3(%arg0: i32) -> (i32, i32) {
    %c0_i32 = arith.constant 0 : i32
    %c0_i32_0 = arith.constant 0 : i32
    %c0_i32_1 = arith.constant 0 : i32
    return %c0_i32, %c0_i32_0 : i32, i32
  }
  func.func @transform_4(%arg0: i32) -> (i32, i32) {
    %c0_i32 = arith.constant 0 : i32
    %c0_i32_0 = arith.constant 0 : i32
    %c0_i32_1 = arith.constant 0 : i32
    return %c0_i32, %c0_i32_0 : i32, i32
  }
  func.func @transform_5(%arg0: i32) -> (i32, i32) {
    %c0_i32 = arith.constant 0 : i32
    %c0_i32_0 = arith.constant 0 : i32
    %c0_i32_1 = arith.constant 0 : i32
    return %c0_i32, %c0_i32_0 : i32, i32
  }
  func.func @transform_6(%arg0: i32) -> (i32, i32) {
    %c0_i32 = arith.constant 0 : i32
    %c0_i32_0 = arith.constant 0 : i32
    %c0_i32_1 = arith.constant 0 : i32
    return %c0_i32, %c0_i32_0 : i32, i32
  }
  func.func @transform_7(%arg0: i32) -> (i32, i32) {
    %c0_i32 = arith.constant 0 : i32
    %c0_i32_0 = arith.constant 0 : i32
    %c0_i32_1 = arith.constant 0 : i32
    return %c0_i32, %c0_i32_0 : i32, i32
  }
  func.func @transform_8(%arg0: i32) -> (i32, i32) {
    %c0_i32 = arith.constant 0 : i32
    %c0_i32_0 = arith.constant 0 : i32
    %c0_i32_1 = arith.constant 0 : i32
    return %c0_i32, %c0_i32_0 : i32, i32
  }
  func.func @transform_9(%arg0: i32) -> (i32, i32) {
    %c0_i32 = arith.constant 0 : i32
    %c0_i32_0 = arith.constant 0 : i32
    %c0_i32_1 = arith.constant 0 : i32
    return %c0_i32, %c0_i32_0 : i32, i32
  }
  func.func @transform_10(%arg0: i32) -> (i32, i32) {
    %c0_i32 = arith.constant 0 : i32
    %c0_i32_0 = arith.constant 0 : i32
    %c0_i32_1 = arith.constant 0 : i32
    return %c0_i32, %c0_i32_0 : i32, i32
  }
  func.func @transform_11(%arg0: i32) -> (i32, i32) {
    %c0_i32 = arith.constant 0 : i32
    %c0_i32_0 = arith.constant 0 : i32
    return %c0_i32, %arg0 : i32, i32
  }
}

</mosaic_0001>

<llo_original>
// kernel: tpu_custom_call.1
$region0: #{tpu_custom_call.1}
  #allocation0 [shape = 'u32[]', space=smem, size = 0x4, offset = 0x4, fixed_abs, tag = 'smem constant byte address 0x4 - core index']
  #allocation1 [shape = 'u32[144,128]{1,0:T(1,128)}', space=vmem, size = 0x12000, scoped, tag = 'internal scratch']
  %s0 = inlined_call_operand.vmem [shape: f32[8,1024], index: 0, kind: input, shape index: {}]
  %s1 = inlined_call_operand.vmem [shape: f32[8,24], index: 1, kind: input, shape index: {}]
  %s2 = inlined_call_operand.vmem [shape: f32[8,1], index: 2, kind: input, shape index: {}]
  %s3 = inlined_call_operand.vmem [shape: f32[8,24], index: 3, kind: input, shape index: {}]
  %s4 = inlined_call_operand.vmem [shape: f32[8,1], index: 4, kind: input, shape index: {}]
  %s5 = inlined_call_operand.vmem [shape: f32[2,8], index: 5, kind: input, shape index: {}]
  %s6 = inlined_call_operand.vmem [shape: f32[2,1], index: 6, kind: input, shape index: {}]
  %s7 = inlined_call_operand.vmem [shape: f32[8,2], index: 7, kind: input, shape index: {}]
  %s8 = inlined_call_operand.vmem [shape: f32[8,1], index: 8, kind: input, shape index: {}]
  %s9 = inlined_call_operand.vmem [shape: f32[512,4], index: 9, kind: input, shape index: {}]
  %s10 = inlined_call_operand.vmem [shape: f32[4,512], index: 10, kind: input, shape index: {}]
  %s11 = inlined_call_operand.hbm [shape: f32[8,1024], index: 11, kind: output, shape index: {}]
  %s12 = sld [smem:[#allocation0]]
  $region77: #{tpu_custom_call.1} parent=0
    _
  %s14 = ssub.s32 1, %s12
  %s15 = scalar_select 0, %s14, %s12
  $region1: #{tpu_custom_call.1} parent=0
    #allocation2 [shape = 'u8[32768]{0}', space=vmem, size = 0x8000, scoped, tag = 'output window, operand 0']
    #allocation3 [shape = 's32[2]{0}', space=sflag, size = 0x8, scoped, tag = 'scoped memory for tpu_custom_call.1']
    %16 = vsyncpa [#allocation3], 0
    %s17 = scalar_lea.sflag [#allocation3], 1
    %18 = vsyncpa %s17, 0
    loop: start=0, step=1, limit=4
    $region2: #{tpu_custom_call.1} parent=1 // loop_pre_header
      _
    $region3: #{tpu_custom_call.1} parent=1 // loop_header
      %s20 = sphi 0, %s24
      %p21 = scmp.ge.s32.totalorder %s20, 4
      %s30 = sphi 0, %s32
      %s33 = sphi 0, %s30
      %s34 = sphi 0, %s33
      %s50 = sphi 0, %s34
      %s54 = sphi 0, %s54
      %s56 = sphi 0, %s54
      %s57 = sphi 0, %s56
      %s71 = sphi 0, %s57
      %s75 = sphi 0, %s75
      %s77 = sphi 0, %s75
      %s78 = sphi 0, %s77
      %s92 = sphi 0, %s78
      %s96 = sphi 0, %s96
      %s98 = sphi 0, %s96
      %s99 = sphi 0, %s98
      %s113 = sphi 0, %s99
      %s117 = sphi 0, %s117
      %s119 = sphi 0, %s117
      %s120 = sphi 0, %s119
      %s134 = sphi 0, %s120
      %s138 = sphi 0, %s138
      %s140 = sphi 0, %s138
      %s141 = sphi 0, %s140
      %s155 = sphi 0, %s141
      %s159 = sphi 0, %s159
      %s161 = sphi 0, %s159
      %s162 = sphi 0, %s161
      %s176 = sphi 0, %s162
      %s180 = sphi 0, %s180
      %s182 = sphi 0, %s180
      %s183 = sphi 0, %s182
      %s197 = sphi 0, %s183
      %s201 = sphi 0, %s201
      %s203 = sphi 0, %s201
      %s204 = sphi 0, %s203
      %s218 = sphi 0, %s204
      %s222 = sphi 0, %s222
      %s224 = sphi 0, %s222
      %s225 = sphi 0, %s224
      %s239 = sphi 0, %s225
      %s243 = sphi 0, %s243
      %s245 = sphi 0, %s243
      %s246 = sphi 0, %s245
      %s260 = sphi 0, %s246
      %s266 = sphi 0, %s268
      %s269 = sphi 0, %s266
      %s270 = sphi 0, %s269
      %s286 = sphi 0, %s270
    $region4: #{tpu_custom_call.1} parent=1 // loop_header_branch
      %23 = sbr.rel (%p21) target = $region8
    $region5: #{tpu_custom_call.1} parent=1 // loop_body
      %s25 = ssub.s32 %s20, 1
      %s26 = ssub.s32 %s20, 2
      %s27 = sadd.s32 %s20, 1
      %s28 = ssub.s32 %s20, %s27
      %p29 = scmp.eq.s32.totalorder %s28, 0
      %s31 = sadd.s32 %s30, 1
      %s32 = scalar_select %p29, %s30, %s31
      %p35 = pneg %p29
      %p36 = scmp.eq.s32.totalorder %s20, 1
      %p37 = por %p35, %p36
      %p38 = scmp.ne.s32.totalorder %s30, %s33
      %p39 = scmp.eq.s32.totalorder %s20, 0
      %p40 = por %p38, %p39
      %p41 = scmp.ne.s32.totalorder %s30, %s33
      %p42 = scmp.eq.s32.totalorder %s25, 1
      %p43 = por %p41, %p42
      %p44 = scmp.ne.s32.totalorder %s33, %s34
      %p45 = scmp.eq.s32.totalorder %s25, 0
      %p46 = por %p44, %p45
      %p47 = scmp.ne.s32.totalorder %s33, %s34
      %p48 = scmp.eq.s32.totalorder %s26, 1
      %p49 = por %p47, %p48
      %p51 = scmp.ne.s32.totalorder %s34, %s50
      %p52 = scmp.eq.s32.totalorder %s26, 0
      %p53 = por %p51, %p52
      %s55 = sadd.s32 %s54, 1
      %p58 = scmp.eq.s32.totalorder %s20, 1
      %p59 = scmp.ne.s32.totalorder %s54, %s56
      %p60 = scmp.eq.s32.totalorder %s20, 0
      %p61 = por %p59, %p60
      %p62 = scmp.ne.s32.totalorder %s54, %s56
      %p63 = scmp.eq.s32.totalorder %s25, 1
      %p64 = por %p62, %p63
      %p65 = scmp.ne.s32.totalorder %s56, %s57
      %p66 = scmp.eq.s32.totalorder %s25, 0
      %p67 = por %p65, %p66
      %p68 = scmp.ne.s32.totalorder %s56, %s57
      %p69 = scmp.eq.s32.totalorder %s26, 1
      %p70 = por %p68, %p69
      %p72 = scmp.ne.s32.totalorder %s57, %s71
      %p73 = scmp.eq.s32.totalorder %s26, 0
      %p74 = por %p72, %p73
      %s76 = sadd.s32 %s75, 1
      %p79 = scmp.eq.s32.totalorder %s20, 1
      %p80 = scmp.ne.s32.totalorder %s75, %s77
      %p81 = scmp.eq.s32.totalorder %s20, 0
      %p82 = por %p80, %p81
      %p83 = scmp.ne.s32.totalorder %s75, %s77
      %p84 = scmp.eq.s32.totalorder %s25, 1
      %p85 = por %p83, %p84
      %p86 = scmp.ne.s32.totalorder %s77, %s78
      %p87 = scmp.eq.s32.totalorder %s25, 0
      %p88 = por %p86, %p87
      %p89 = scmp.ne.s32.totalorder %s77, %s78
      %p90 = scmp.eq.s32.totalorder %s26, 1
      %p91 = por %p89, %p90
      %p93 = scmp.ne.s32.totalorder %s78, %s92
      %p94 = scmp.eq.s32.totalorder %s26, 0
      %p95 = por %p93, %p94
      %s97 = sadd.s32 %s96, 1
      %p100 = scmp.eq.s32.totalorder %s20, 1
      %p101 = scmp.ne.s32.totalorder %s96, %s98
      %p102 = scmp.eq.s32.totalorder %s20, 0
      %p103 = por %p101, %p102
      %p104 = scmp.ne.s32.totalorder %s96, %s98
      %p105 = scmp.eq.s32.totalorder %s25, 1
      %p106 = por %p104, %p105
      %p107 = scmp.ne.s32.totalorder %s98, %s99
      %p108 = scmp.eq.s32.totalorder %s25, 0
      %p109 = por %p107, %p108
      %p110 = scmp.ne.s32.totalorder %s98, %s99
      %p111 = scmp.eq.s32.totalorder %s26, 1
      %p112 = por %p110, %p111
      %p114 = scmp.ne.s32.totalorder %s99, %s113
      %p115 = scmp.eq.s32.totalorder %s26, 0
      %p116 = por %p114, %p115
      %s118 = sadd.s32 %s117, 1
      %p121 = scmp.eq.s32.totalorder %s20, 1
      %p122 = scmp.ne.s32.totalorder %s117, %s119
      %p123 = scmp.eq.s32.totalorder %s20, 0
      %p124 = por %p122, %p123
      %p125 = scmp.ne.s32.totalorder %s117, %s119
      %p126 = scmp.eq.s32.totalorder %s25, 1
      %p127 = por %p125, %p126
      %p128 = scmp.ne.s32.totalorder %s119, %s120
      %p129 = scmp.eq.s32.totalorder %s25, 0
      %p130 = por %p128, %p129
      %p131 = scmp.ne.s32.totalorder %s119, %s120
      %p132 = scmp.eq.s32.totalorder %s26, 1
      %p133 = por %p131, %p132
      %p135 = scmp.ne.s32.totalorder %s120, %s134
      %p136 = scmp.eq.s32.totalorder %s26, 0
      %p137 = por %p135, %p136
      %s139 = sadd.s32 %s138, 1
      %p142 = scmp.eq.s32.totalorder %s20, 1
      %p143 = scmp.ne.s32.totalorder %s138, %s140
      %p144 = scmp.eq.s32.totalorder %s20, 0
      %p145 = por %p143, %p144
      %p146 = scmp.ne.s32.totalorder %s138, %s140
      %p147 = scmp.eq.s32.totalorder %s25, 1
      %p148 = por %p146, %p147
      %p149 = scmp.ne.s32.totalorder %s140, %s141
      %p150 = scmp.eq.s32.totalorder %s25, 0
      %p151 = por %p149, %p150
      %p152 = scmp.ne.s32.totalorder %s140, %s141
      %p153 = scmp.eq.s32.totalorder %s26, 1
      %p154 = por %p152, %p153
      %p156 = scmp.ne.s32.totalorder %s141, %s155
      %p157 = scmp.eq.s32.totalorder %s26, 0
      %p158 = por %p156, %p157
      %s160 = sadd.s32 %s159, 1
      %p163 = scmp.eq.s32.totalorder %s20, 1
      %p164 = scmp.ne.s32.totalorder %s159, %s161
      %p165 = scmp.eq.s32.totalorder %s20, 0
      %p166 = por %p164, %p165
      %p167 = scmp.ne.s32.totalorder %s159, %s161
      %p168 = scmp.eq.s32.totalorder %s25, 1
      %p169 = por %p167, %p168
      %p170 = scmp.ne.s32.totalorder %s161, %s162
      %p171 = scmp.eq.s32.totalorder %s25, 0
      %p172 = por %p170, %p171
      %p173 = scmp.ne.s32.totalorder %s161, %s162
      %p174 = scmp.eq.s32.totalorder %s26, 1
      %p175 = por %p173, %p174
      %p177 = scmp.ne.s32.totalorder %s162, %s176
      %p178 = scmp.eq.s32.totalorder %s26, 0
      %p179 = por %p177, %p178
      %s181 = sadd.s32 %s180, 1
      %p184 = scmp.eq.s32.totalorder %s20, 1
      %p185 = scmp.ne.s32.totalorder %s180, %s182
      %p186 = scmp.eq.s32.totalorder %s20, 0
      %p187 = por %p185, %p186
      %p188 = scmp.ne.s32.totalorder %s180, %s182
      %p189 = scmp.eq.s32.totalorder %s25, 1
      %p190 = por %p188, %p189
      %p191 = scmp.ne.s32.totalorder %s182, %s183
      %p192 = scmp.eq.s32.totalorder %s25, 0
      %p193 = por %p191, %p192
      %p194 = scmp.ne.s32.totalorder %s182, %s183
      %p195 = scmp.eq.s32.totalorder %s26, 1
      %p196 = por %p194, %p195
      %p198 = scmp.ne.s32.totalorder %s183, %s197
      %p199 = scmp.eq.s32.totalorder %s26, 0
      %p200 = por %p198, %p199
      %s202 = sadd.s32 %s201, 1
      %p205 = scmp.eq.s32.totalorder %s20, 1
      %p206 = scmp.ne.s32.totalorder %s201, %s203
      %p207 = scmp.eq.s32.totalorder %s20, 0
      %p208 = por %p206, %p207
      %p209 = scmp.ne.s32.totalorder %s201, %s203
      %p210 = scmp.eq.s32.totalorder %s25, 1
      %p211 = por %p209, %p210
      %p212 = scmp.ne.s32.totalorder %s203, %s204
      %p213 = scmp.eq.s32.totalorder %s25, 0
      %p214 = por %p212, %p213
      %p215 = scmp.ne.s32.totalorder %s203, %s204
      %p216 = scmp.eq.s32.totalorder %s26, 1
      %p217 = por %p215, %p216
      %p219 = scmp.ne.s32.totalorder %s204, %s218
      %p220 = scmp.eq.s32.totalorder %s26, 0
      %p221 = por %p219, %p220
      %s223 = sadd.s32 %s222, 1
      %p226 = scmp.eq.s32.totalorder %s20, 1
      %p227 = scmp.ne.s32.totalorder %s222, %s224
      %p228 = scmp.eq.s32.totalorder %s20, 0
      %p229 = por %p227, %p228
      %p230 = scmp.ne.s32.totalorder %s222, %s224
      %p231 = scmp.eq.s32.totalorder %s25, 1
      %p232 = por %p230, %p231
      %p233 = scmp.ne.s32.totalorder %s224, %s225
      %p234 = scmp.eq.s32.totalorder %s25, 0
      %p235 = por %p233, %p234
      %p236 = scmp.ne.s32.totalorder %s224, %s225
      %p237 = scmp.eq.s32.totalorder %s26, 1
      %p238 = por %p236, %p237
      %p240 = scmp.ne.s32.totalorder %s225, %s239
      %p241 = scmp.eq.s32.totalorder %s26, 0
      %p242 = por %p240, %p241
      %s244 = sadd.s32 %s243, 1
      %p247 = scmp.eq.s32.totalorder %s20, 1
      %p248 = scmp.ne.s32.totalorder %s243, %s245
      %p249 = scmp.eq.s32.totalorder %s20, 0
      %p250 = por %p248, %p249
      %p251 = scmp.ne.s32.totalorder %s243, %s245
      %p252 = scmp.eq.s32.totalorder %s25, 1
      %p253 = por %p251, %p252
      %p254 = scmp.ne.s32.totalorder %s245, %s246
      %p255 = scmp.eq.s32.totalorder %s25, 0
      %p256 = por %p254, %p255
      %p257 = scmp.ne.s32.totalorder %s245, %s246
      %p258 = scmp.eq.s32.totalorder %s26, 1
      %p259 = por %p257, %p258
      %p261 = scmp.ne.s32.totalorder %s246, %s260
      %p262 = scmp.eq.s32.totalorder %s26, 0
      %p263 = por %p261, %p262
      %s264 = ssub.s32 %s20, %s27
      %p265 = scmp.eq.s32.totalorder %s264, 0
      %s267 = sadd.s32 %s266, 1
      %s268 = scalar_select %p265, %s266, %s267
      %p271 = pneg %p265
      %p272 = scmp.eq.s32.totalorder %s20, 1
      %p273 = por %p271, %p272
      %p274 = scmp.ne.s32.totalorder %s266, %s269
      %p275 = scmp.eq.s32.totalorder %s20, 0
      %p276 = por %p274, %p275
      %p277 = scmp.ne.s32.totalorder %s266, %s269
      %p278 = scmp.eq.s32.totalorder %s25, 1
      %p279 = por %p277, %p278
      %p280 = scmp.ne.s32.totalorder %s269, %s270
      %p281 = scmp.eq.s32.totalorder %s25, 0
      %p282 = por %p280, %p281
      %p283 = scmp.ne.s32.totalorder %s269, %s270
      %p284 = scmp.eq.s32.totalorder %s26, 1
      %p285 = por %p283, %p284
      %p287 = scmp.ne.s32.totalorder %s270, %s286
      %p288 = scmp.eq.s32.totalorder %s26, 0
      %p289 = por %p287, %p288
      %p290 = scmp.le.s32.totalorder 1, %s20
      %p291 = scmp.lt.s32.totalorder %s20, 3
      %p292 = pnand %p290, %p291
      %p293 = pneg %p292
      // Predicated region
      $region9: #{tpu_custom_call.1} parent=5 // pred_check
        _
      $region10: #{tpu_custom_call.1} parent=5 // pred_check_branch
        %295 = sbr.rel (%p292) target = $region12
      $region11: #{tpu_custom_call.1} parent=5 // pred_region
        %s296 = ssub.s32 %s20, 1
        // Predicated region
        $region13: #{tpu_custom_call.1} parent=11 // pred_check
          %p297 = pneg %p67
        $region14: #{tpu_custom_call.1} parent=11 // pred_check_branch
          %299 = sbr.rel (%p297) target = $region16
        $region15: #{tpu_custom_call.1} parent=11 // pred_region
          _
        $region16: #{tpu_custom_call.1} parent=11 // pred_fallthru
          _
        // Predicated region
        $region17: #{tpu_custom_call.1} parent=11 // pred_check
          %p300 = pneg %p88
        $region18: #{tpu_custom_call.1} parent=11 // pred_check_branch
          %302 = sbr.rel (%p300) target = $region20
        $region19: #{tpu_custom_call.1} parent=11 // pred_region
          _
        $region20: #{tpu_custom_call.1} parent=11 // pred_fallthru
          _
        // Predicated region
        $region21: #{tpu_custom_call.1} parent=11 // pred_check
          %p303 = pneg %p109
        $region22: #{tpu_custom_call.1} parent=11 // pred_check_branch
          %305 = sbr.rel (%p303) target = $region24
        $region23: #{tpu_custom_call.1} parent=11 // pred_region
          _
        $region24: #{tpu_custom_call.1} parent=11 // pred_fallthru
          _
        // Predicated region
        $region25: #{tpu_custom_call.1} parent=11 // pred_check
          %p306 = pneg %p130
        $region26: #{tpu_custom_call.1} parent=11 // pred_check_branch
          %308 = sbr.rel (%p306) target = $region28
        $region27: #{tpu_custom_call.1} parent=11 // pred_region
          _
        $region28: #{tpu_custom_call.1} parent=11 // pred_fallthru
          _
        // Predicated region
        $region29: #{tpu_custom_call.1} parent=11 // pred_check
          %p309 = pneg %p151
        $region30: #{tpu_custom_call.1} parent=11 // pred_check_branch
          %311 = sbr.rel (%p309) target = $region32
        $region31: #{tpu_custom_call.1} parent=11 // pred_region
          _
        $region32: #{tpu_custom_call.1} parent=11 // pred_fallthru
          _
        // Predicated region
        $region33: #{tpu_custom_call.1} parent=11 // pred_check
          %p312 = pneg %p172
        $region34: #{tpu_custom_call.1} parent=11 // pred_check_branch
          %314 = sbr.rel (%p312) target = $region36
        $region35: #{tpu_custom_call.1} parent=11 // pred_region
          _
        $region36: #{tpu_custom_call.1} parent=11 // pred_fallthru
          _
        // Predicated region
        $region37: #{tpu_custom_call.1} parent=11 // pred_check
          %p315 = pneg %p193
        $region38: #{tpu_custom_call.1} parent=11 // pred_check_branch
          %317 = sbr.rel (%p315) target = $region40
        $region39: #{tpu_custom_call.1} parent=11 // pred_region
          _
        $region40: #{tpu_custom_call.1} parent=11 // pred_fallthru
          _
        // Predicated region
        $region41: #{tpu_custom_call.1} parent=11 // pred_check
          %p318 = pneg %p214
        $region42: #{tpu_custom_call.1} parent=11 // pred_check_branch
          %320 = sbr.rel (%p318) target = $region44
        $region43: #{tpu_custom_call.1} parent=11 // pred_region
          _
        $region44: #{tpu_custom_call.1} parent=11 // pred_fallthru
          _
        // Predicated region
        $region45: #{tpu_custom_call.1} parent=11 // pred_check
          %p321 = pneg %p235
        $region46: #{tpu_custom_call.1} parent=11 // pred_check_branch
          %323 = sbr.rel (%p321) target = $region48
        $region47: #{tpu_custom_call.1} parent=11 // pred_region
          _
        $region48: #{tpu_custom_call.1} parent=11 // pred_fallthru
          _
        // Predicated region
        $region49: #{tpu_custom_call.1} parent=11 // pred_check
          %p324 = pneg %p256
        $region50: #{tpu_custom_call.1} parent=11 // pred_check_branch
          %326 = sbr.rel (%p324) target = $region52
        $region51: #{tpu_custom_call.1} parent=11 // pred_region
          _
        $region52: #{tpu_custom_call.1} parent=11 // pred_fallthru
          _
      $region12: #{tpu_custom_call.1} parent=5 // pred_fallthru
        _
      %p327 = scmp.lt.s32.totalorder %s20, 2
      // Predicated region
      $region53: #{tpu_custom_call.1} parent=5 // pred_check
        %p328 = pneg %p327
      $region54: #{tpu_custom_call.1} parent=5 // pred_check_branch
        %330 = sbr.rel (%p328) target = $region56
      $region55: #{tpu_custom_call.1} parent=5 // pred_region
        // Predicated region
        $region57: #{tpu_custom_call.1} parent=55 // pred_check
          %p331 = pneg %p40
        $region58: #{tpu_custom_call.1} parent=55 // pred_check_branch
          %333 = sbr.rel (%p331) target = $region60
        $region59: #{tpu_custom_call.1} parent=55 // pred_region
          %s334 = smul.u32 4, %s20
          %p335 = scmp.lt.s32.totalorder %s334, 7
          %s336 = scalar_select %p335, %s334, 7
          %s337 = smul.addr %s336, 8
          %s338 = scalar_lea.vmem %s0, %s337
          %s339 = smul.u32 4, %s20
        $region60: #{tpu_custom_call.1} parent=55 // pred_fallthru
          _
      $region56: #{tpu_custom_call.1} parent=5 // pred_fallthru
        _
      %p340 = scmp.le.s32.totalorder 1, %s20
      %p341 = scmp.lt.s32.totalorder %s20, 3
      %p342 = pnand %p340, %p341
      %p343 = pneg %p342
      // Predicated region
      $region61: #{tpu_custom_call.1} parent=5 // pred_check
        _
      $region62: #{tpu_custom_call.1} parent=5 // pred_check_branch
        %345 = sbr.rel (%p342) target = $region64
      $region63: #{tpu_custom_call.1} parent=5 // pred_region
        %s346 = ssub.s32 %s20, 1
        %s347 = smul.u32 4, %s25
        %p348 = scmp.lt.s32.totalorder %s347, 7
        %s349 = scalar_select %p348, %s347, 7
        %s350 = smul.addr %s349, 8
        %s351 = scalar_lea.vmem %s0, %s350
        %p352 = pneg %p46
        %p353 = pneg %p43
        %p354 = pneg %p67
        %p355 = pneg %p64
        %p356 = pneg %p88
        %p357 = pneg %p85
        %p358 = pneg %p109
        %p359 = pneg %p106
        %p360 = pneg %p130
        %p361 = pneg %p127
        %p362 = pneg %p151
        %p363 = pneg %p148
        %p364 = pneg %p172
        %p365 = pneg %p169
        %p366 = pneg %p193
        %p367 = pneg %p190
        %p368 = pneg %p214
        %p369 = pneg %p211
        %p370 = pneg %p235
        %p371 = pneg %p232
        %p372 = pneg %p256
        %p373 = pneg %p253
        %p374 = pneg %p282
        %p375 = pneg %p279
        %s376 = sand.u32 %s269, 1
        %s377 = scalar_lea.sflag [#allocation3], %s376
        %s378 = sand.u32 %s269, 1
        %s379 = smul.addr %s378, 32
        %s380 = scalar_lea.vmem [#allocation2], %s379
        %s381 = smul.u32 4, %s25
        %p382 = scmp.lt.s32.totalorder %s381, 7
        %s383 = scalar_select %p382, %s381, 7
        %s384 = smul.addr %s383, 8
        %s385 = scalar_lea.vmem %s0, %s384
        %s386 = smul.u32 4, %s25
        %s387 = smul.u32 4, %s25
        %v388 = vld [vmem:[%s385] sm:$0xff]
        %v389 = vld [vmem:[%s385 + $0x8] sm:$0xff]
        %v390 = vld [vmem:[%s385 + $0x10] sm:$0xff]
        %v391 = vld [vmem:[%s385 + $0x18] sm:$0xff]
        %v392 = vlaneseq
        %v393 = vand.u32 %v392, 127
        %v394 = vadd.s32 %v393, 128
        %v395 = vadd.s32 %v393, 256
        %v396 = vadd.s32 %v393, 384
        %vm397 = vcmp.lt.s32.totalorder %v393, 0
        %v398 = vsub.s32 0, %v393
        %v399 = vsel %vm397, %v398, %v393
        %v400 = vshrl.u32 %v399, 7
        %v401 = vand.u32 %v399, 127
        %v402 = vsub.s32 0, %v401
        %v403 = vsel %vm397, %v402, %v401
        %vm404 = vcmp.lt.s32.totalorder %v394, 0
        %v405 = vsub.s32 0, %v394
        %v406 = vsel %vm404, %v405, %v394
        %v407 = vshrl.u32 %v406, 7
        %v408 = vand.u32 %v406, 127
        %v409 = vsub.s32 0, %v408
        %v410 = vsel %vm404, %v409, %v408
        %vm411 = vcmp.lt.s32.totalorder %v395, 0
        %v412 = vsub.s32 0, %v395
        %v413 = vsel %vm411, %v412, %v395
        %v414 = vshrl.u32 %v413, 7
        %v415 = vand.u32 %v413, 127
        %v416 = vsub.s32 0, %v415
        %v417 = vsel %vm411, %v416, %v415
        %vm418 = vcmp.lt.s32.totalorder %v396, 0
        %v419 = vsub.s32 0, %v396
        %v420 = vsel %vm418, %v419, %v396
        %v421 = vshrl.u32 %v420, 7
        %v422 = vand.u32 %v420, 127
        %v423 = vsub.s32 0, %v422
        %v424 = vsel %vm418, %v423, %v422
        %vm425 = vcmp.ne.s32.totalorder %v403, 0
        %vm426 = vcmp.ne.s32.totalorder %v410, 0
        %vm427 = vcmp.ne.s32.totalorder %v417, 0
        %vm428 = vcmp.ne.s32.totalorder %v424, 0
        %vm429 = vcmp.lt.s32.totalorder %v403, 0
        %vm430 = vcmp.lt.s32.totalorder %v410, 0
        %vm431 = vcmp.lt.s32.totalorder %v417, 0
        %vm432 = vcmp.lt.s32.totalorder %v424, 0
        %vm433 = vmand %vm429, %vm425
        %vm434 = vmand %vm430, %vm426
        %vm435 = vmand %vm431, %vm427
        %vm436 = vmand %vm432, %vm428
        %v437 = vadd.s32 %v403, 128
        %v438 = vadd.s32 %v410, 128
        %v439 = vadd.s32 %v417, 128
        %v440 = vadd.s32 %v424, 128
        %v441 = vsel %vm433, %v437, %v403
        %v442 = vsel %vm434, %v438, %v410
        %v443 = vsel %vm435, %v439, %v417
        %v444 = vsel %vm436, %v440, %v424
        %445 = vrot.lane.b32.xlu0 %v388, 1
        %v446 = vpop.permute.xlu0 %445
        %447 = vrot.lane.b32.xlu0 %v389, 1
        %v448 = vpop.permute.xlu0 %447
        %449 = vrot.lane.b32.xlu0 %v390, 1
        %v450 = vpop.permute.xlu0 %449
        %451 = vrot.lane.b32.xlu0 %v391, 1
        %v452 = vpop.permute.xlu0 %451
        %vm453 = vcmp.lt.s32.totalorder %v393, 1
        %v454 = vsel %vm453, %v450, %v452
        %v455 = vsel %vm453, %v448, %v450
        %v456 = vsel %vm453, %v446, %v448
        %v457 = vsel %vm453, %v452, %v446
        %vm458 = vcmp.ge.s32.totalorder %v441, 1
        %vm459 = vcmp.ge.s32.totalorder %v442, 1
        %vm460 = vcmp.ge.s32.totalorder %v443, 1
        %vm461 = vcmp.ge.s32.totalorder %v444, 1
        %v462 = vsel %vm458, 1, 0
        %v463 = vsel %vm459, 1, 0
        %v464 = vsel %vm460, 1, 0
        %v465 = vsel %vm461, 1, 0
        %vm466 = vcmp.eq.s32.totalorder %v462, 1
        %vm467 = vcmp.eq.s32.totalorder %v463, 1
        %vm468 = vcmp.eq.s32.totalorder %v464, 1
        %vm469 = vcmp.eq.s32.totalorder %v465, 1
        %v470 = vsel %vm466, %v457, 0.0
        %v471 = vsel %vm467, %v456, 0.0
        %v472 = vsel %vm468, %v455, 0.0
        %v473 = vsel %vm469, %v454, 0.0
        %474 = vrot.lane.b32.xlu0 %v388, 127
        %v475 = vpop.permute.xlu0 %474
        %476 = vrot.lane.b32.xlu0 %v389, 127
        %v477 = vpop.permute.xlu0 %476
        %478 = vrot.lane.b32.xlu0 %v390, 127
        %v479 = vpop.permute.xlu0 %478
        %480 = vrot.lane.b32.xlu0 %v391, 127
        %v481 = vpop.permute.xlu0 %480
        %vm482 = vcmp.lt.s32.totalorder %v393, 127
        %v483 = vsel %vm482, %v479, %v481
        %v484 = vsel %vm482, %v477, %v479
        %v485 = vsel %vm482, %v475, %v477
        %v486 = vsel %vm482, %v481, %v475
        %vm487 = vcmp.lt.s32.totalorder %v441, 127
        %vm488 = vcmp.lt.s32.totalorder %v442, 127
        %vm489 = vcmp.lt.s32.totalorder %v443, 127
        %vm490 = vcmp.lt.s32.totalorder %v444, 127
        %v491 = vsel %vm487, 1, 0
        %v492 = vsel %vm488, 1, 0
        %v493 = vsel %vm489, 1, 0
        %v494 = vsel %vm490, 1, 0
        %vm495 = vcmp.eq.s32.totalorder %v491, 1
        %vm496 = vcmp.eq.s32.totalorder %v492, 1
        %vm497 = vcmp.eq.s32.totalorder %v493, 1
        %vm498 = vcmp.eq.s32.totalorder %v494, 1
        %v499 = vsel %vm495, %v485, 0.0
        %v500 = vsel %vm496, %v484, 0.0
        %v501 = vsel %vm497, %v483, 0.0
        %v502 = vsel %vm498, %v486, 0.0
        %v503 = vld [vmem:[%s1] sm:$0xff]
        %v504 = vld [vmem:[%s2] sm:$0xff]
        %506 = vset.pattern.permute.xlu0 0
        %507 = vperm.xlu0 %506, %v504
        %v508 = vpop.permute.xlu0 %507
        %vm510 = vcmask 195584
        %v512 = vsel %vm510, %v503, 0
        %514 = vmatprep.subr.mxu0 %v471
        %515 = vmatpush1.msra.mxu0 %v470
        %516 = vmatprep.subr.mxu0 %v389
        %517 = vmatpush1.msra.mxu0 %v388
        %518 = vmatprep.subr.mxu0 %v500
        %519 = vmatpush1.msra.mxu0 %v499
        %520 = vmatprep.subr.mxu0 0.0
        %521 = vmatpush1.msra.mxu0 0.0
        %522 = vmatprep.subr.mxu0 0.0
        %523 = vmatpush1.msra.mxu0 0.0
        %524 = vmatprep.subr.mxu0 0.0
        %525 = vmatpush1.msra.mxu0 0.0
        %526 = vmatprep.subr.mxu0 0.0
        %527 = vmatpush1.msra.mxu0 0.0
        %528 = vmatprep.subr.mxu0 0.0
        %529 = vmatpush1.msra.mxu0 0.0
        %530 = vmatprep.subr.mxu0 0.0
        %531 = vmatpush1.msra.mxu0 0.0
        %532 = vmatprep.subr.mxu0 0.0
        %533 = vmatpush1.msra.mxu0 0.0
        %534 = vmatprep.subr.mxu0 0.0
        %535 = vmatpush1.msra.mxu0 0.0
        %536 = vmatprep.subr.mxu0 0.0
        %537 = vmatpush1.msra.mxu0 0.0
        %538 = vmatprep.subr.mxu0 0.0
        %539 = vmatpush1.msra.mxu0 0.0
        %540 = vmatprep.subr.mxu0 0.0
        %541 = vmatpush1.msra.mxu0 0.0
        %542 = vmatprep.subr.mxu0 0.0
        %543 = vmatpush1.msra.mxu0 0.0
        %544 = vmatprep.subr.mxu0 0.0
        %545 = vmatpush1.msra.mxu0 0.0
        %546 = vmatprep.subr.mxu0 0.0
        %547 = vmatpush1.msra.mxu0 0.0
        %548 = vmatprep.subr.mxu0 0.0
        %549 = vmatpush1.msra.mxu0 0.0
        %550 = vmatprep.subr.mxu0 0.0
        %551 = vmatpush1.msra.mxu0 0.0
        %552 = vmatprep.subr.mxu0 0.0
        %553 = vmatpush1.msra.mxu0 0.0
        %554 = vmatprep.subr.mxu0 0.0
        %555 = vmatpush1.msra.mxu0 0.0
        %556 = vmatprep.subr.mxu0 0.0
        %557 = vmatpush1.msra.mxu0 0.0
        %558 = vmatprep.subr.mxu0 0.0
        %559 = vmatpush1.msra.mxu0 0.0
        %560 = vmatprep.subr.mxu0 0.0
        %561 = vmatpush1.msra.mxu0 0.0
        %562 = vmatprep.subr.mxu0 0.0
        %563 = vmatpush1.msra.mxu0 0.0
        %564 = vmatprep.subr.mxu0 0.0
        %565 = vmatpush1.msra.mxu0 0.0
        %566 = vmatprep.subr.mxu0 0.0
        %567 = vmatpush1.msra.mxu0 0.0
        %568 = vmatprep.subr.mxu0 0.0
        %569 = vmatpush1.msra.mxu0 0.0
        %570 = vmatprep.subr.mxu0 0.0
        %571 = vmatpush1.msra.mxu0 0.0
        %572 = vmatprep.subr.mxu0 0.0
        %573 = vmatpush1.msra.mxu0 0.0
        %574 = vmatprep.subr.mxu0 0.0
        %575 = vmatpush1.msra.mxu0 0.0
        %576 = vmatprep.subr.mxu0 0.0
        %577 = vmatpush1.msra.mxu0 0.0
        %578 = vmatprep.mubr.f32.mxu0 0.0
        %579 = vmatmul.mubr.f32.gmra.mrb[0].mxu0 %v512
        %v580 = vpop.f32.mrb[0].mxu0
        %v581 = vadd.f32 %v508, %v580
        %v582 = vpop.f32.mrb[0].mxu0
        %v583 = vadd.f32 %v508, %v582
        %584 = vdwg.mxu0
        %585 = vmatprep.subr.mxu0 %v473
        %586 = vmatpush1.msra.mxu0 %v472
        %587 = vmatprep.subr.mxu0 %v391
        %588 = vmatpush1.msra.mxu0 %v390
        %589 = vmatprep.subr.mxu0 %v502
        %590 = vmatpush1.msra.mxu0 %v501
        %591 = vmatprep.subr.mxu0 0.0
        %592 = vmatpush1.msra.mxu0 0.0
        %593 = vmatprep.subr.mxu0 0.0
        %594 = vmatpush1.msra.mxu0 0.0
        %595 = vmatprep.subr.mxu0 0.0
        %596 = vmatpush1.msra.mxu0 0.0
        %597 = vmatprep.subr.mxu0 0.0
        %598 = vmatpush1.msra.mxu0 0.0
        %599 = vmatprep.subr.mxu0 0.0
        %600 = vmatpush1.msra.mxu0 0.0
        %601 = vmatprep.subr.mxu0 0.0
        %602 = vmatpush1.msra.mxu0 0.0
        %603 = vmatprep.subr.mxu0 0.0
        %604 = vmatpush1.msra.mxu0 0.0
        %605 = vmatprep.subr.mxu0 0.0
        %606 = vmatpush1.msra.mxu0 0.0
        %607 = vmatprep.subr.mxu0 0.0
        %608 = vmatpush1.msra.mxu0 0.0
        %609 = vmatprep.subr.mxu0 0.0
        %610 = vmatpush1.msra.mxu0 0.0
        %611 = vmatprep.subr.mxu0 0.0
        %612 = vmatpush1.msra.mxu0 0.0
        %613 = vmatprep.subr.mxu0 0.0
        %614 = vmatpush1.msra.mxu0 0.0
        %615 = vmatprep.subr.mxu0 0.0
        %616 = vmatpush1.msra.mxu0 0.0
        %617 = vmatprep.subr.mxu0 0.0
        %618 = vmatpush1.msra.mxu0 0.0
        %619 = vmatprep.subr.mxu0 0.0
        %620 = vmatpush1.msra.mxu0 0.0
        %621 = vmatprep.subr.mxu0 0.0
        %622 = vmatpush1.msra.mxu0 0.0
        %623 = vmatprep.subr.mxu0 0.0
        %624 = vmatpush1.msra.mxu0 0.0
        %625 = vmatprep.subr.mxu0 0.0
        %626 = vmatpush1.msra.mxu0 0.0
        %627 = vmatprep.subr.mxu0 0.0
        %628 = vmatpush1.msra.mxu0 0.0
        %629 = vmatprep.subr.mxu0 0.0
        %630 = vmatpush1.msra.mxu0 0.0
        %631 = vmatprep.subr.mxu0 0.0
        %632 = vmatpush1.msra.mxu0 0.0
        %633 = vmatprep.subr.mxu0 0.0
        %634 = vmatpush1.msra.mxu0 0.0
        %635 = vmatprep.subr.mxu0 0.0
        %636 = vmatpush1.msra.mxu0 0.0
        %637 = vmatprep.subr.mxu0 0.0
        %638 = vmatpush1.msra.mxu0 0.0
        %639 = vmatprep.subr.mxu0 0.0
        %640 = vmatpush1.msra.mxu0 0.0
        %641 = vmatprep.subr.mxu0 0.0
        %642 = vmatpush1.msra.mxu0 0.0
        %643 = vmatprep.subr.mxu0 0.0
        %644 = vmatpush1.msra.mxu0 0.0
        %645 = vmatprep.subr.mxu0 0.0
        %646 = vmatpush1.msra.mxu0 0.0
        %647 = vmatprep.subr.mxu0 0.0
        %648 = vmatpush1.msra.mxu0 0.0
        %649 = vmatprep.mubr.f32.mxu0 0.0
        %650 = vmatmul.mubr.f32.gmra.mrb[0].mxu0 %v512
        %v651 = vpop.f32.mrb[0].mxu0
        %v652 = vadd.f32 %v508, %v651
        %v653 = vpop.f32.mrb[0].mxu0
        %v654 = vadd.f32 %v508, %v653
        %655 = vdwg.mxu0
        %v656 = vmax.f32 %v581, 0.0
        %v657 = vmax.f32 %v583, 0.0
        %v658 = vmax.f32 %v652, 0.0
        %v659 = vmax.f32 %v654, 0.0
        %660 = vrot.lane.b32.xlu0 %v656, 1
        %v661 = vpop.permute.xlu0 %660
        %662 = vrot.lane.b32.xlu0 %v657, 1
        %v663 = vpop.permute.xlu0 %662
        %664 = vrot.lane.b32.xlu0 %v658, 1
        %v665 = vpop.permute.xlu0 %664
        %666 = vrot.lane.b32.xlu0 %v659, 1
        %v667 = vpop.permute.xlu0 %666
        %v668 = vsel %vm453, %v665, %v667
        %v669 = vsel %vm453, %v663, %v665
        %v670 = vsel %vm453, %v661, %v663
        %v671 = vsel %vm453, %v667, %v661
        %v672 = vsel %vm466, %v671, 0.0
        %v673 = vsel %vm467, %v670, 0.0
        %v674 = vsel %vm468, %v669, 0.0
        %v675 = vsel %vm469, %v668, 0.0
        %676 = vrot.lane.b32.xlu0 %v656, 127
        %v677 = vpop.permute.xlu0 %676
        %678 = vrot.lane.b32.xlu0 %v657, 127
        %v679 = vpop.permute.xlu0 %678
        %680 = vrot.lane.b32.xlu0 %v658, 127
        %v681 = vpop.permute.xlu0 %680
        %682 = vrot.lane.b32.xlu0 %v659, 127
        %v683 = vpop.permute.xlu0 %682
        %v684 = vsel %vm482, %v681, %v683
        %v685 = vsel %vm482, %v679, %v681
        %v686 = vsel %vm482, %v677, %v679
        %v687 = vsel %vm482, %v683, %v677
        %v688 = vsel %vm495, %v686, 0.0
        %v689 = vsel %vm496, %v685, 0.0
        %v690 = vsel %vm497, %v684, 0.0
        %v691 = vsel %vm498, %v687, 0.0
        %v692 = vld [vmem:[%s3] sm:$0xff]
        %v693 = vld [vmem:[%s4] sm:$0xff]
        %695 = vset.pattern.permute.xlu0 0
        %696 = vperm.xlu0 %695, %v693
        %v697 = vpop.permute.xlu0 %696
        %v700 = vsel %vm510, %v692, 0
        %702 = vmatprep.subr.mxu0 %v673
        %703 = vmatpush1.msra.mxu0 %v672
        %704 = vmatprep.subr.mxu0 %v657
        %705 = vmatpush1.msra.mxu0 %v656
        %706 = vmatprep.subr.mxu0 %v689
        %707 = vmatpush1.msra.mxu0 %v688
        %708 = vmatprep.subr.mxu0 0.0
        %709 = vmatpush1.msra.mxu0 0.0
        %710 = vmatprep.subr.mxu0 0.0
        %711 = vmatpush1.msra.mxu0 0.0
        %712 = vmatprep.subr.mxu0 0.0
        %713 = vmatpush1.msra.mxu0 0.0
        %714 = vmatprep.subr.mxu0 0.0
        %715 = vmatpush1.msra.mxu0 0.0
        %716 = vmatprep.subr.mxu0 0.0
        %717 = vmatpush1.msra.mxu0 0.0
        %718 = vmatprep.subr.mxu0 0.0
        %719 = vmatpush1.msra.mxu0 0.0
        %720 = vmatprep.subr.mxu0 0.0
        %721 = vmatpush1.msra.mxu0 0.0
        %722 = vmatprep.subr.mxu0 0.0
        %723 = vmatpush1.msra.mxu0 0.0
        %724 = vmatprep.subr.mxu0 0.0
        %725 = vmatpush1.msra.mxu0 0.0
        %726 = vmatprep.subr.mxu0 0.0
        %727 = vmatpush1.msra.mxu0 0.0
        %728 = vmatprep.subr.mxu0 0.0
        %729 = vmatpush1.msra.mxu0 0.0
        %730 = vmatprep.subr.mxu0 0.0
        %731 = vmatpush1.msra.mxu0 0.0
        %732 = vmatprep.subr.mxu0 0.0
        %733 = vmatpush1.msra.mxu0 0.0
        %734 = vmatprep.subr.mxu0 0.0
        %735 = vmatpush1.msra.mxu0 0.0
        %736 = vmatprep.subr.mxu0 0.0
        %737 = vmatpush1.msra.mxu0 0.0
        %738 = vmatprep.subr.mxu0 0.0
        %739 = vmatpush1.msra.mxu0 0.0
        %740 = vmatprep.subr.mxu0 0.0
        %741 = vmatpush1.msra.mxu0 0.0
        %742 = vmatprep.subr.mxu0 0.0
        %743 = vmatpush1.msra.mxu0 0.0
        %744 = vmatprep.subr.mxu0 0.0
        %745 = vmatpush1.msra.mxu0 0.0
        %746 = vmatprep.subr.mxu0 0.0
        %747 = vmatpush1.msra.mxu0 0.0
        %748 = vmatprep.subr.mxu0 0.0
        %749 = vmatpush1.msra.mxu0 0.0
        %750 = vmatprep.subr.mxu0 0.0
        %751 = vmatpush1.msra.mxu0 0.0
        %752 = vmatprep.subr.mxu0 0.0
        %753 = vmatpush1.msra.mxu0 0.0
        %754 = vmatprep.subr.mxu0 0.0
        %755 = vmatpush1.msra.mxu0 0.0
        %756 = vmatprep.subr.mxu0 0.0
        %757 = vmatpush1.msra.mxu0 0.0
        %758 = vmatprep.subr.mxu0 0.0
        %759 = vmatpush1.msra.mxu0 0.0
        %760 = vmatprep.subr.mxu0 0.0
        %761 = vmatpush1.msra.mxu0 0.0
        %762 = vmatprep.subr.mxu0 0.0
        %763 = vmatpush1.msra.mxu0 0.0
        %764 = vmatprep.subr.mxu0 0.0
        %765 = vmatpush1.msra.mxu0 0.0
        %766 = vmatprep.mubr.f32.mxu0 0.0
        %767 = vmatmul.mubr.f32.gmra.mrb[0].mxu0 %v700
        %v768 = vpop.f32.mrb[0].mxu0
        %v769 = vadd.f32 %v697, %v768
        %v770 = vpop.f32.mrb[0].mxu0
        %v771 = vadd.f32 %v697, %v770
        %772 = vdwg.mxu0
        %773 = vmatprep.subr.mxu0 %v675
        %774 = vmatpush1.msra.mxu0 %v674
        %775 = vmatprep.subr.mxu0 %v659
        %776 = vmatpush1.msra.mxu0 %v658
        %777 = vmatprep.subr.mxu0 %v691
        %778 = vmatpush1.msra.mxu0 %v690
        %779 = vmatprep.subr.mxu0 0.0
        %780 = vmatpush1.msra.mxu0 0.0
        %781 = vmatprep.subr.mxu0 0.0
        %782 = vmatpush1.msra.mxu0 0.0
        %783 = vmatprep.subr.mxu0 0.0
        %784 = vmatpush1.msra.mxu0 0.0
        %785 = vmatprep.subr.mxu0 0.0
        %786 = vmatpush1.msra.mxu0 0.0
        %787 = vmatprep.subr.mxu0 0.0
        %788 = vmatpush1.msra.mxu0 0.0
        %789 = vmatprep.subr.mxu0 0.0
        %790 = vmatpush1.msra.mxu0 0.0
        %791 = vmatprep.subr.mxu0 0.0
        %792 = vmatpush1.msra.mxu0 0.0
        %793 = vmatprep.subr.mxu0 0.0
        %794 = vmatpush1.msra.mxu0 0.0
        %795 = vmatprep.subr.mxu0 0.0
        %796 = vmatpush1.msra.mxu0 0.0
        %797 = vmatprep.subr.mxu0 0.0
        %798 = vmatpush1.msra.mxu0 0.0
        %799 = vmatprep.subr.mxu0 0.0
        %800 = vmatpush1.msra.mxu0 0.0
        %801 = vmatprep.subr.mxu0 0.0
        %802 = vmatpush1.msra.mxu0 0.0
        %803 = vmatprep.subr.mxu0 0.0
        %804 = vmatpush1.msra.mxu0 0.0
        %805 = vmatprep.subr.mxu0 0.0
        %806 = vmatpush1.msra.mxu0 0.0
        %807 = vmatprep.subr.mxu0 0.0
        %808 = vmatpush1.msra.mxu0 0.0
        %809 = vmatprep.subr.mxu0 0.0
        %810 = vmatpush1.msra.mxu0 0.0
        %811 = vmatprep.subr.mxu0 0.0
        %812 = vmatpush1.msra.mxu0 0.0
        %813 = vmatprep.subr.mxu0 0.0
        %814 = vmatpush1.msra.mxu0 0.0
        %815 = vmatprep.subr.mxu0 0.0
        %816 = vmatpush1.msra.mxu0 0.0
        %817 = vmatprep.subr.mxu0 0.0
        %818 = vmatpush1.msra.mxu0 0.0
        %819 = vmatprep.subr.mxu0 0.0
        %820 = vmatpush1.msra.mxu0 0.0
        %821 = vmatprep.subr.mxu0 0.0
        %822 = vmatpush1.msra.mxu0 0.0
        %823 = vmatprep.subr.mxu0 0.0
        %824 = vmatpush1.msra.mxu0 0.0
        %825 = vmatprep.subr.mxu0 0.0
        %826 = vmatpush1.msra.mxu0 0.0
        %827 = vmatprep.subr.mxu0 0.0
        %828 = vmatpush1.msra.mxu0 0.0
        %829 = vmatprep.subr.mxu0 0.0
        %830 = vmatpush1.msra.mxu0 0.0
        %831 = vmatprep.subr.mxu0 0.0
        %832 = vmatpush1.msra.mxu0 0.0
        %833 = vmatprep.subr.mxu0 0.0
        %834 = vmatpush1.msra.mxu0 0.0
        %835 = vmatprep.subr.mxu0 0.0
        %836 = vmatpush1.msra.mxu0 0.0
        %837 = vmatprep.mubr.f32.mxu0 0.0
        %838 = vmatmul.mubr.f32.gmra.mrb[0].mxu0 %v700
        %v839 = vpop.f32.mrb[0].mxu0
        %v840 = vadd.f32 %v697, %v839
        %v841 = vpop.f32.mrb[0].mxu0
        %v842 = vadd.f32 %v697, %v841
        %843 = vdwg.mxu0
        %v844 = vmax.f32 %v769, 0.0
        %v845 = vmax.f32 %v771, 0.0
        %v846 = vmax.f32 %v840, 0.0
        %v847 = vmax.f32 %v842, 0.0
        %v848 = vld [vmem:[%s9] sm:$0xff]
        %v849 = vld [vmem:[%s9 + $0x8] sm:$0xff]
        %v850 = vld [vmem:[%s9 + $0x10] sm:$0xff]
        %v851 = vld [vmem:[%s9 + $0x18] sm:$0xff]
        %v852 = vld [vmem:[%s9 + $0x20] sm:$0xff]
        %v853 = vld [vmem:[%s9 + $0x28] sm:$0xff]
        %v854 = vld [vmem:[%s9 + $0x30] sm:$0xff]
        %v855 = vld [vmem:[%s9 + $0x38] sm:$0xff]
        %v856 = vld [vmem:[%s9 + $0x40] sm:$0xff]
        %v857 = vld [vmem:[%s9 + $0x48] sm:$0xff]
        %v858 = vld [vmem:[%s9 + $0x50] sm:$0xff]
        %v859 = vld [vmem:[%s9 + $0x58] sm:$0xff]
        %v860 = vld [vmem:[%s9 + $0x60] sm:$0xff]
        %v861 = vld [vmem:[%s9 + $0x68] sm:$0xff]
        %v862 = vld [vmem:[%s9 + $0x70] sm:$0xff]
        %v863 = vld [vmem:[%s9 + $0x78] sm:$0xff]
        %v864 = vld [vmem:[%s9 + $0x80] sm:$0xff]
        %v865 = vld [vmem:[%s9 + $0x88] sm:$0xff]
        %v866 = vld [vmem:[%s9 + $0x90] sm:$0xff]
        %v867 = vld [vmem:[%s9 + $0x98] sm:$0xff]
        %v868 = vld [vmem:[%s9 + $0xa0] sm:$0xff]
        %v869 = vld [vmem:[%s9 + $0xa8] sm:$0xff]
        %v870 = vld [vmem:[%s9 + $0xb0] sm:$0xff]
        %v871 = vld [vmem:[%s9 + $0xb8] sm:$0xff]
        %v872 = vld [vmem:[%s9 + $0xc0] sm:$0xff]
        %v873 = vld [vmem:[%s9 + $0xc8] sm:$0xff]
        %v874 = vld [vmem:[%s9 + $0xd0] sm:$0xff]
        %v875 = vld [vmem:[%s9 + $0xd8] sm:$0xff]
        %v876 = vld [vmem:[%s9 + $0xe0] sm:$0xff]
        %v877 = vld [vmem:[%s9 + $0xe8] sm:$0xff]
        %v878 = vld [vmem:[%s9 + $0xf0] sm:$0xff]
        %v879 = vld [vmem:[%s9 + $0xf8] sm:$0xff]
        %v880 = vld [vmem:[%s9 + $0x100] sm:$0xff]
        %v881 = vld [vmem:[%s9 + $0x108] sm:$0xff]
        %v882 = vld [vmem:[%s9 + $0x110] sm:$0xff]
        %v883 = vld [vmem:[%s9 + $0x118] sm:$0xff]
        %v884 = vld [vmem:[%s9 + $0x120] sm:$0xff]
        %v885 = vld [vmem:[%s9 + $0x128] sm:$0xff]
        %v886 = vld [vmem:[%s9 + $0x130] sm:$0xff]
        %v887 = vld [vmem:[%s9 + $0x138] sm:$0xff]
        %v888 = vld [vmem:[%s9 + $0x140] sm:$0xff]
        %v889 = vld [vmem:[%s9 + $0x148] sm:$0xff]
        %v890 = vld [vmem:[%s9 + $0x150] sm:$0xff]
        %v891 = vld [vmem:[%s9 + $0x158] sm:$0xff]
        %v892 = vld [vmem:[%s9 + $0x160] sm:$0xff]
        %v893 = vld [vmem:[%s9 + $0x168] sm:$0xff]
        %v894 = vld [vmem:[%s9 + $0x170] sm:$0xff]
        %v895 = vld [vmem:[%s9 + $0x178] sm:$0xff]
        %v896 = vld [vmem:[%s9 + $0x180] sm:$0xff]
        %v897 = vld [vmem:[%s9 + $0x188] sm:$0xff]
        %v898 = vld [vmem:[%s9 + $0x190] sm:$0xff]
        %v899 = vld [vmem:[%s9 + $0x198] sm:$0xff]
        %v900 = vld [vmem:[%s9 + $0x1a0] sm:$0xff]
        %v901 = vld [vmem:[%s9 + $0x1a8] sm:$0xff]
        %v902 = vld [vmem:[%s9 + $0x1b0] sm:$0xff]
        %v903 = vld [vmem:[%s9 + $0x1b8] sm:$0xff]
        %v904 = vld [vmem:[%s9 + $0x1c0] sm:$0xff]
        %v905 = vld [vmem:[%s9 + $0x1c8] sm:$0xff]
        %v906 = vld [vmem:[%s9 + $0x1d0] sm:$0xff]
        %v907 = vld [vmem:[%s9 + $0x1d8] sm:$0xff]
        %v908 = vld [vmem:[%s9 + $0x1e0] sm:$0xff]
        %v909 = vld [vmem:[%s9 + $0x1e8] sm:$0xff]
        %v910 = vld [vmem:[%s9 + $0x1f0] sm:$0xff]
        %v911 = vld [vmem:[%s9 + $0x1f8] sm:$0xff]
        %912 = vmatprep.subr.mxu0 0.0
        %913 = vmatpush1.msra.mxu0 %v848
        %914 = vmatprep.subr.mxu0 0.0
        %915 = vmatpush1.msra.mxu0 %v849
        %916 = vmatprep.subr.mxu0 0.0
        %917 = vmatpush1.msra.mxu0 %v850
        %918 = vmatprep.subr.mxu0 0.0
        %919 = vmatpush1.msra.mxu0 %v851
        %920 = vmatprep.subr.mxu0 0.0
        %921 = vmatpush1.msra.mxu0 %v852
        %922 = vmatprep.subr.mxu0 0.0
        %923 = vmatpush1.msra.mxu0 %v853
        %924 = vmatprep.subr.mxu0 0.0
        %925 = vmatpush1.msra.mxu0 %v854
        %926 = vmatprep.subr.mxu0 0.0
        %927 = vmatpush1.msra.mxu0 %v855
        %928 = vmatprep.subr.mxu0 0.0
        %929 = vmatpush1.msra.mxu0 %v856
        %930 = vmatprep.subr.mxu0 0.0
        %931 = vmatpush1.msra.mxu0 %v857
        %932 = vmatprep.subr.mxu0 0.0
        %933 = vmatpush1.msra.mxu0 %v858
        %934 = vmatprep.subr.mxu0 0.0
        %935 = vmatpush1.msra.mxu0 %v859
        %936 = vmatprep.subr.mxu0 0.0
        %937 = vmatpush1.msra.mxu0 %v860
        %938 = vmatprep.subr.mxu0 0.0
        %939 = vmatpush1.msra.mxu0 %v861
        %940 = vmatprep.subr.mxu0 0.0
        %941 = vmatpush1.msra.mxu0 %v862
        %942 = vmatprep.subr.mxu0 0.0
        %943 = vmatpush1.msra.mxu0 %v863
        %944 = vmatprep.subr.mxu0 0.0
        %945 = vmatpush1.msra.mxu0 %v864
        %946 = vmatprep.subr.mxu0 0.0
        %947 = vmatpush1.msra.mxu0 %v865
        %948 = vmatprep.subr.mxu0 0.0
        %949 = vmatpush1.msra.mxu0 %v866
        %950 = vmatprep.subr.mxu0 0.0
        %951 = vmatpush1.msra.mxu0 %v867
        %952 = vmatprep.subr.mxu0 0.0
        %953 = vmatpush1.msra.mxu0 %v868
        %954 = vmatprep.subr.mxu0 0.0
        %955 = vmatpush1.msra.mxu0 %v869
        %956 = vmatprep.subr.mxu0 0.0
        %957 = vmatpush1.msra.mxu0 %v870
        %958 = vmatprep.subr.mxu0 0.0
        %959 = vmatpush1.msra.mxu0 %v871
        %960 = vmatprep.subr.mxu0 0.0
        %961 = vmatpush1.msra.mxu0 %v872
        %962 = vmatprep.subr.mxu0 0.0
        %963 = vmatpush1.msra.mxu0 %v873
        %964 = vmatprep.subr.mxu0 0.0
        %965 = vmatpush1.msra.mxu0 %v874
        %966 = vmatprep.subr.mxu0 0.0
        %967 = vmatpush1.msra.mxu0 %v875
        %968 = vmatprep.subr.mxu0 0.0
        %969 = vmatpush1.msra.mxu0 %v876
        %970 = vmatprep.subr.mxu0 0.0
        %971 = vmatpush1.msra.mxu0 %v877
        %972 = vmatprep.subr.mxu0 0.0
        %973 = vmatpush1.msra.mxu0 %v878
        %974 = vmatprep.subr.mxu0 0.0
        %975 = vmatpush1.msra.mxu0 %v879
        %976 = vmatprep.mubr.f32.mxu0 %v845
        %977 = vmatmul.mubr.f32.gmra.mrb[0].mxu0 %v844
        %v978 = vpop.f32.mrb[0].mxu0
        %v979 = vadd.f32 0.0, %v978
        %v980 = vpop.f32.mrb[0].mxu0
        %981 = vdwg.mxu0
        %982 = vmatprep.subr.mxu0 0.0
        %983 = vmatpush1.msra.mxu0 %v880
        %984 = vmatprep.subr.mxu0 0.0
        %985 = vmatpush1.msra.mxu0 %v881
        %986 = vmatprep.subr.mxu0 0.0
        %987 = vmatpush1.msra.mxu0 %v882
        %988 = vmatprep.subr.mxu0 0.0
        %989 = vmatpush1.msra.mxu0 %v883
        %990 = vmatprep.subr.mxu0 0.0
        %991 = vmatpush1.msra.mxu0 %v884
        %992 = vmatprep.subr.mxu0 0.0
        %993 = vmatpush1.msra.mxu0 %v885
        %994 = vmatprep.subr.mxu0 0.0
        %995 = vmatpush1.msra.mxu0 %v886
        %996 = vmatprep.subr.mxu0 0.0
        %997 = vmatpush1.msra.mxu0 %v887
        %998 = vmatprep.subr.mxu0 0.0
        %999 = vmatpush1.msra.mxu0 %v888
        %1000 = vmatprep.subr.mxu0 0.0
        %1001 = vmatpush1.msra.mxu0 %v889
        %1002 = vmatprep.subr.mxu0 0.0
        %1003 = vmatpush1.msra.mxu0 %v890
        %1004 = vmatprep.subr.mxu0 0.0
        %1005 = vmatpush1.msra.mxu0 %v891
        %1006 = vmatprep.subr.mxu0 0.0
        %1007 = vmatpush1.msra.mxu0 %v892
        %1008 = vmatprep.subr.mxu0 0.0
        %1009 = vmatpush1.msra.mxu0 %v893
        %1010 = vmatprep.subr.mxu0 0.0
        %1011 = vmatpush1.msra.mxu0 %v894
        %1012 = vmatprep.subr.mxu0 0.0
        %1013 = vmatpush1.msra.mxu0 %v895
        %1014 = vmatprep.subr.mxu0 0.0
        %1015 = vmatpush1.msra.mxu0 %v896
        %1016 = vmatprep.subr.mxu0 0.0
        %1017 = vmatpush1.msra.mxu0 %v897
        %1018 = vmatprep.subr.mxu0 0.0
        %1019 = vmatpush1.msra.mxu0 %v898
        %1020 = vmatprep.subr.mxu0 0.0
        %1021 = vmatpush1.msra.mxu0 %v899
        %1022 = vmatprep.subr.mxu0 0.0
        %1023 = vmatpush1.msra.mxu0 %v900
        %1024 = vmatprep.subr.mxu0 0.0
        %1025 = vmatpush1.msra.mxu0 %v901
        %1026 = vmatprep.subr.mxu0 0.0
        %1027 = vmatpush1.msra.mxu0 %v902
        %1028 = vmatprep.subr.mxu0 0.0
        %1029 = vmatpush1.msra.mxu0 %v903
        %1030 = vmatprep.subr.mxu0 0.0
        %1031 = vmatpush1.msra.mxu0 %v904
        %1032 = vmatprep.subr.mxu0 0.0
        %1033 = vmatpush1.msra.mxu0 %v905
        %1034 = vmatprep.subr.mxu0 0.0
        %1035 = vmatpush1.msra.mxu0 %v906
        %1036 = vmatprep.subr.mxu0 0.0
        %1037 = vmatpush1.msra.mxu0 %v907
        %1038 = vmatprep.subr.mxu0 0.0
        %1039 = vmatpush1.msra.mxu0 %v908
        %1040 = vmatprep.subr.mxu0 0.0
        %1041 = vmatpush1.msra.mxu0 %v909
        %1042 = vmatprep.subr.mxu0 0.0
        %1043 = vmatpush1.msra.mxu0 %v910
        %1044 = vmatprep.subr.mxu0 0.0
        %1045 = vmatpush1.msra.mxu0 %v911
        %1046 = vmatprep.mubr.f32.mxu0 %v847
        %1047 = vmatmul.mubr.f32.gmra.mrb[0].mxu0 %v846
        %v1048 = vpop.f32.mrb[0].mxu0
        %v1049 = vadd.f32 %v979, %v1048
        %v1050 = vpop.f32.mrb[0].mxu0
        %1051 = vdwg.mxu0
        %v1052 = vld [vmem:[%s5] sm:$0x3]
        %v1053 = vld [vmem:[%s6] sm:$0x3]
        %1055 = vset.pattern.permute.xlu0 0
        %1056 = vperm.xlu0 %1055, %v1053
        %v1057 = vpop.permute.xlu0 %1056
        %vm1059 = vcmask 64512
        %v1061 = vsel %vm1059, %v1052, 0
        %1063 = vmatprep.subr.mxu0 0.0
        %1064 = vmatpush1.msra.mxu0 %v1049
        %1065 = vmatprep.subr.mxu0 0.0
        %1066 = vmatpush1.msra.mxu0 0.0
        %1067 = vmatprep.subr.mxu0 0.0
        %1068 = vmatpush1.msra.mxu0 0.0
        %1069 = vmatprep.subr.mxu0 0.0
        %1070 = vmatpush1.msra.mxu0 0.0
        %1071 = vmatprep.subr.mxu0 0.0
        %1072 = vmatpush1.msra.mxu0 0.0
        %1073 = vmatprep.subr.mxu0 0.0
        %1074 = vmatpush1.msra.mxu0 0.0
        %1075 = vmatprep.subr.mxu0 0.0
        %1076 = vmatpush1.msra.mxu0 0.0
        %1077 = vmatprep.subr.mxu0 0.0
        %1078 = vmatpush1.msra.mxu0 0.0
        %1079 = vmatprep.subr.mxu0 0.0
        %1080 = vmatpush1.msra.mxu0 0.0
        %1081 = vmatprep.subr.mxu0 0.0
        %1082 = vmatpush1.msra.mxu0 0.0
        %1083 = vmatprep.subr.mxu0 0.0
        %1084 = vmatpush1.msra.mxu0 0.0
        %1085 = vmatprep.subr.mxu0 0.0
        %1086 = vmatpush1.msra.mxu0 0.0
        %1087 = vmatprep.subr.mxu0 0.0
        %1088 = vmatpush1.msra.mxu0 0.0
        %1089 = vmatprep.subr.mxu0 0.0
        %1090 = vmatpush1.msra.mxu0 0.0
        %1091 = vmatprep.subr.mxu0 0.0
        %1092 = vmatpush1.msra.mxu0 0.0
        %1093 = vmatprep.subr.mxu0 0.0
        %1094 = vmatpush1.msra.mxu0 0.0
        %1095 = vmatprep.subr.mxu0 0.0
        %1096 = vmatpush1.msra.mxu0 0.0
        %1097 = vmatprep.subr.mxu0 0.0
        %1098 = vmatpush1.msra.mxu0 0.0
        %1099 = vmatprep.subr.mxu0 0.0
        %1100 = vmatpush1.msra.mxu0 0.0
        %1101 = vmatprep.subr.mxu0 0.0
        %1102 = vmatpush1.msra.mxu0 0.0
        %1103 = vmatprep.subr.mxu0 0.0
        %1104 = vmatpush1.msra.mxu0 0.0
        %1105 = vmatprep.subr.mxu0 0.0
        %1106 = vmatpush1.msra.mxu0 0.0
        %1107 = vmatprep.subr.mxu0 0.0
        %1108 = vmatpush1.msra.mxu0 0.0
        %1109 = vmatprep.subr.mxu0 0.0
        %1110 = vmatpush1.msra.mxu0 0.0
        %1111 = vmatprep.subr.mxu0 0.0
        %1112 = vmatpush1.msra.mxu0 0.0
        %1113 = vmatprep.subr.mxu0 0.0
        %1114 = vmatpush1.msra.mxu0 0.0
        %1115 = vmatprep.subr.mxu0 0.0
        %1116 = vmatpush1.msra.mxu0 0.0
        %1117 = vmatprep.subr.mxu0 0.0
        %1118 = vmatpush1.msra.mxu0 0.0
        %1119 = vmatprep.subr.mxu0 0.0
        %1120 = vmatpush1.msra.mxu0 0.0
        %1121 = vmatprep.subr.mxu0 0.0
        %1122 = vmatpush1.msra.mxu0 0.0
        %1123 = vmatprep.subr.mxu0 0.0
        %1124 = vmatpush1.msra.mxu0 0.0
        %1125 = vmatprep.subr.mxu0 0.0
        %1126 = vmatpush1.msra.mxu0 0.0
        %1127 = vmatprep.mubr.f32.mxu0 0.0
        %1128 = vmatmul.mubr.f32.gmra.mrb[0].mxu0 %v1061
        %v1129 = vpop.f32.mrb[0].mxu0
        %v1130 = vadd.f32 %v1057, %v1129
        %v1131 = vpop.f32.mrb[0].mxu0
        %1132 = vdwg.mxu0
        %v1133 = vmax.f32 %v1130, 0.0
        %v1134 = vld [vmem:[%s7] sm:$0xff]
        %v1135 = vld [vmem:[%s8] sm:$0xff]
        %1137 = vset.pattern.permute.xlu0 0
        %1138 = vperm.xlu0 %1137, %v1135
        %v1139 = vpop.permute.xlu0 %1138
        %vm1141 = vcmask 15360
        %v1143 = vsel %vm1141, %v1134, 0
        %vm1145 = vcmask 1041408
        %v1147 = vsel %vm1145, %v1133, 0
        %1149 = vmatprep.subr.mxu0 0.0
        %1150 = vmatpush1.msra.mxu0 %v1147
        %1151 = vmatprep.subr.mxu0 0.0
        %1152 = vmatpush1.msra.mxu0 0.0
        %1153 = vmatprep.subr.mxu0 0.0
        %1154 = vmatpush1.msra.mxu0 0.0
        %1155 = vmatprep.subr.mxu0 0.0
        %1156 = vmatpush1.msra.mxu0 0.0
        %1157 = vmatprep.subr.mxu0 0.0
        %1158 = vmatpush1.msra.mxu0 0.0
        %1159 = vmatprep.subr.mxu0 0.0
        %1160 = vmatpush1.msra.mxu0 0.0
        %1161 = vmatprep.subr.mxu0 0.0
        %1162 = vmatpush1.msra.mxu0 0.0
        %1163 = vmatprep.subr.mxu0 0.0
        %1164 = vmatpush1.msra.mxu0 0.0
        %1165 = vmatprep.subr.mxu0 0.0
        %1166 = vmatpush1.msra.mxu0 0.0
        %1167 = vmatprep.subr.mxu0 0.0
        %1168 = vmatpush1.msra.mxu0 0.0
        %1169 = vmatprep.subr.mxu0 0.0
        %1170 = vmatpush1.msra.mxu0 0.0
        %1171 = vmatprep.subr.mxu0 0.0
        %1172 = vmatpush1.msra.mxu0 0.0
        %1173 = vmatprep.subr.mxu0 0.0
        %1174 = vmatpush1.msra.mxu0 0.0
        %1175 = vmatprep.subr.mxu0 0.0
        %1176 = vmatpush1.msra.mxu0 0.0
        %1177 = vmatprep.subr.mxu0 0.0
        %1178 = vmatpush1.msra.mxu0 0.0
        %1179 = vmatprep.subr.mxu0 0.0
        %1180 = vmatpush1.msra.mxu0 0.0
        %1181 = vmatprep.subr.mxu0 0.0
        %1182 = vmatpush1.msra.mxu0 0.0
        %1183 = vmatprep.subr.mxu0 0.0
        %1184 = vmatpush1.msra.mxu0 0.0
        %1185 = vmatprep.subr.mxu0 0.0
        %1186 = vmatpush1.msra.mxu0 0.0
        %1187 = vmatprep.subr.mxu0 0.0
        %1188 = vmatpush1.msra.mxu0 0.0
        %1189 = vmatprep.subr.mxu0 0.0
        %1190 = vmatpush1.msra.mxu0 0.0
        %1191 = vmatprep.subr.mxu0 0.0
        %1192 = vmatpush1.msra.mxu0 0.0
        %1193 = vmatprep.subr.mxu0 0.0
        %1194 = vmatpush1.msra.mxu0 0.0
        %1195 = vmatprep.subr.mxu0 0.0
        %1196 = vmatpush1.msra.mxu0 0.0
        %1197 = vmatprep.subr.mxu0 0.0
        %1198 = vmatpush1.msra.mxu0 0.0
        %1199 = vmatprep.subr.mxu0 0.0
        %1200 = vmatpush1.msra.mxu0 0.0
        %1201 = vmatprep.subr.mxu0 0.0
        %1202 = vmatpush1.msra.mxu0 0.0
        %1203 = vmatprep.subr.mxu0 0.0
        %1204 = vmatpush1.msra.mxu0 0.0
        %1205 = vmatprep.subr.mxu0 0.0
        %1206 = vmatpush1.msra.mxu0 0.0
        %1207 = vmatprep.subr.mxu0 0.0
        %1208 = vmatpush1.msra.mxu0 0.0
        %1209 = vmatprep.subr.mxu0 0.0
        %1210 = vmatpush1.msra.mxu0 0.0
        %1211 = vmatprep.subr.mxu0 0.0
        %1212 = vmatpush1.msra.mxu0 0.0
        %1213 = vmatprep.mubr.f32.mxu0 0.0
        %1214 = vmatmul.mubr.f32.gmra.mrb[0].mxu0 %v1143
        %v1215 = vpop.f32.mrb[0].mxu0
        %v1216 = vadd.f32 %v1139, %v1215
        %v1217 = vpop.f32.mrb[0].mxu0
        %1218 = vdwg.mxu0
        %v1219 = vxor.u32 %v1216, 2147483648
        %v1220 = vmul.f32 %v1219, 1.442695
        %v1221 = vpow.pop %v1220
        %v1222 = vadd.f32 %v1221, 1.0
        %v1223 = vrcp.pop %v1222
        %v1224 = vmul.f32 1.0, %v1223
        %v1225 = vld [vmem:[%s10] sm:$0xff]
        %v1226 = vld [vmem:[%s10 + $0x8] sm:$0xff]
        %v1229 = vcombine.high %v1225, %v1225
        %v1230 = vcombine.high %v1226, %v1226
        %vm1231 = vcmask 31744
        %v1233 = vsel %vm1231, %v1224, 0
        %vm1235 = vcmask 1043456
        %v1236 = vsel %vm1235, %v1225, 0
        %v1238 = vsel %vm1235, %v1229, 0
        %v1240 = vsel %vm1235, %v1226, 0
        %v1242 = vsel %vm1235, %v1230, 0
        %1244 = vmatprep.subr.mxu0 %v1238
        %1245 = vmatpush1.msra.mxu0 %v1236
        %1246 = vmatprep.subr.mxu0 0.0
        %1247 = vmatpush1.msra.mxu0 0.0
        %1248 = vmatprep.subr.mxu0 0.0
        %1249 = vmatpush1.msra.mxu0 0.0
        %1250 = vmatprep.subr.mxu0 0.0
        %1251 = vmatpush1.msra.mxu0 0.0
        %1252 = vmatprep.subr.mxu0 0.0
        %1253 = vmatpush1.msra.mxu0 0.0
        %1254 = vmatprep.subr.mxu0 0.0
        %1255 = vmatpush1.msra.mxu0 0.0
        %1256 = vmatprep.subr.mxu0 0.0
        %1257 = vmatpush1.msra.mxu0 0.0
        %1258 = vmatprep.subr.mxu0 0.0
        %1259 = vmatpush1.msra.mxu0 0.0
        %1260 = vmatprep.subr.mxu0 0.0
        %1261 = vmatpush1.msra.mxu0 0.0
        %1262 = vmatprep.subr.mxu0 0.0
        %1263 = vmatpush1.msra.mxu0 0.0
        %1264 = vmatprep.subr.mxu0 0.0
        %1265 = vmatpush1.msra.mxu0 0.0
        %1266 = vmatprep.subr.mxu0 0.0
        %1267 = vmatpush1.msra.mxu0 0.0
        %1268 = vmatprep.subr.mxu0 0.0
        %1269 = vmatpush1.msra.mxu0 0.0
        %1270 = vmatprep.subr.mxu0 0.0
        %1271 = vmatpush1.msra.mxu0 0.0
        %1272 = vmatprep.subr.mxu0 0.0
        %1273 = vmatpush1.msra.mxu0 0.0
        %1274 = vmatprep.subr.mxu0 0.0
        %1275 = vmatpush1.msra.mxu0 0.0
        %1276 = vmatprep.subr.mxu0 0.0
        %1277 = vmatpush1.msra.mxu0 0.0
        %1278 = vmatprep.subr.mxu0 0.0
        %1279 = vmatpush1.msra.mxu0 0.0
        %1280 = vmatprep.subr.mxu0 0.0
        %1281 = vmatpush1.msra.mxu0 0.0
        %1282 = vmatprep.subr.mxu0 0.0
        %1283 = vmatpush1.msra.mxu0 0.0
        %1284 = vmatprep.subr.mxu0 0.0
        %1285 = vmatpush1.msra.mxu0 0.0
        %1286 = vmatprep.subr.mxu0 0.0
        %1287 = vmatpush1.msra.mxu0 0.0
        %1288 = vmatprep.subr.mxu0 0.0
        %1289 = vmatpush1.msra.mxu0 0.0
        %1290 = vmatprep.subr.mxu0 0.0
        %1291 = vmatpush1.msra.mxu0 0.0
        %1292 = vmatprep.subr.mxu0 0.0
        %1293 = vmatpush1.msra.mxu0 0.0
        %1294 = vmatprep.subr.mxu0 0.0
        %1295 = vmatpush1.msra.mxu0 0.0
        %1296 = vmatprep.subr.mxu0 0.0
        %1297 = vmatpush1.msra.mxu0 0.0
        %1298 = vmatprep.subr.mxu0 0.0
        %1299 = vmatpush1.msra.mxu0 0.0
        %1300 = vmatprep.subr.mxu0 0.0
        %1301 = vmatpush1.msra.mxu0 0.0
        %1302 = vmatprep.subr.mxu0 0.0
        %1303 = vmatpush1.msra.mxu0 0.0
        %1304 = vmatprep.subr.mxu0 0.0
        %1305 = vmatpush1.msra.mxu0 0.0
        %1306 = vmatprep.subr.mxu0 0.0
        %1307 = vmatpush1.msra.mxu0 0.0
        %1308 = vmatprep.mubr.f32.mxu0 0.0
        %1309 = vmatmul.mubr.f32.gmra.mrb[0].mxu0 %v1233
        %v1310 = vpop.f32.mrb[0].mxu0
        %v1311 = vadd.f32 0.0, %v1310
        %v1312 = vpop.f32.mrb[0].mxu0
        %v1313 = vadd.f32 0.0, %v1312
        %1314 = vdwg.mxu0
        %1315 = vmatprep.subr.mxu0 %v1242
        %1316 = vmatpush1.msra.mxu0 %v1240
        %1317 = vmatprep.subr.mxu0 0.0
        %1318 = vmatpush1.msra.mxu0 0.0
        %1319 = vmatprep.subr.mxu0 0.0
        %1320 = vmatpush1.msra.mxu0 0.0
        %1321 = vmatprep.subr.mxu0 0.0
        %1322 = vmatpush1.msra.mxu0 0.0
        %1323 = vmatprep.subr.mxu0 0.0
        %1324 = vmatpush1.msra.mxu0 0.0
        %1325 = vmatprep.subr.mxu0 0.0
        %1326 = vmatpush1.msra.mxu0 0.0
        %1327 = vmatprep.subr.mxu0 0.0
        %1328 = vmatpush1.msra.mxu0 0.0
        %1329 = vmatprep.subr.mxu0 0.0
        %1330 = vmatpush1.msra.mxu0 0.0
        %1331 = vmatprep.subr.mxu0 0.0
        %1332 = vmatpush1.msra.mxu0 0.0
        %1333 = vmatprep.subr.mxu0 0.0
        %1334 = vmatpush1.msra.mxu0 0.0
        %1335 = vmatprep.subr.mxu0 0.0
        %1336 = vmatpush1.msra.mxu0 0.0
        %1337 = vmatprep.subr.mxu0 0.0
        %1338 = vmatpush1.msra.mxu0 0.0
        %1339 = vmatprep.subr.mxu0 0.0
        %1340 = vmatpush1.msra.mxu0 0.0
        %1341 = vmatprep.subr.mxu0 0.0
        %1342 = vmatpush1.msra.mxu0 0.0
        %1343 = vmatprep.subr.mxu0 0.0
        %1344 = vmatpush1.msra.mxu0 0.0
        %1345 = vmatprep.subr.mxu0 0.0
        %1346 = vmatpush1.msra.mxu0 0.0
        %1347 = vmatprep.subr.mxu0 0.0
        %1348 = vmatpush1.msra.mxu0 0.0
        %1349 = vmatprep.subr.mxu0 0.0
        %1350 = vmatpush1.msra.mxu0 0.0
        %1351 = vmatprep.subr.mxu0 0.0
        %1352 = vmatpush1.msra.mxu0 0.0
        %1353 = vmatprep.subr.mxu0 0.0
        %1354 = vmatpush1.msra.mxu0 0.0
        %1355 = vmatprep.subr.mxu0 0.0
        %1356 = vmatpush1.msra.mxu0 0.0
        %1357 = vmatprep.subr.mxu0 0.0
        %1358 = vmatpush1.msra.mxu0 0.0
        %1359 = vmatprep.subr.mxu0 0.0
        %1360 = vmatpush1.msra.mxu0 0.0
        %1361 = vmatprep.subr.mxu0 0.0
        %1362 = vmatpush1.msra.mxu0 0.0
        %1363 = vmatprep.subr.mxu0 0.0
        %1364 = vmatpush1.msra.mxu0 0.0
        %1365 = vmatprep.subr.mxu0 0.0
        %1366 = vmatpush1.msra.mxu0 0.0
        %1367 = vmatprep.subr.mxu0 0.0
        %1368 = vmatpush1.msra.mxu0 0.0
        %1369 = vmatprep.subr.mxu0 0.0
        %1370 = vmatpush1.msra.mxu0 0.0
        %1371 = vmatprep.subr.mxu0 0.0
        %1372 = vmatpush1.msra.mxu0 0.0
        %1373 = vmatprep.subr.mxu0 0.0
        %1374 = vmatpush1.msra.mxu0 0.0
        %1375 = vmatprep.subr.mxu0 0.0
        %1376 = vmatpush1.msra.mxu0 0.0
        %1377 = vmatprep.subr.mxu0 0.0
        %1378 = vmatpush1.msra.mxu0 0.0
        %1379 = vmatprep.mubr.f32.mxu0 0.0
        %1380 = vmatmul.mubr.f32.gmra.mrb[0].mxu0 %v1233
        %v1381 = vpop.f32.mrb[0].mxu0
        %v1382 = vadd.f32 0.0, %v1381
        %v1383 = vpop.f32.mrb[0].mxu0
        %v1384 = vadd.f32 0.0, %v1383
        %1385 = vdwg.mxu0
        %v1386 = vmul.f32 %v844, %v1311
        %v1387 = vmul.f32 %v845, %v1313
        %v1388 = vmul.f32 %v846, %v1382
        %v1389 = vmul.f32 %v847, %v1384
        %v1390 = vadd.f32 %v388, %v1386
        %v1391 = vadd.f32 %v389, %v1387
        %v1392 = vadd.f32 %v390, %v1388
        %v1393 = vadd.f32 %v391, %v1389
        %1394 = vst [vmem:[%s380] sm:$0xff] %v1390
        %1395 = vst [vmem:[%s380 + $0x8] sm:$0xff] %v1391
        %1396 = vst [vmem:[%s380 + $0x10] sm:$0xff] %v1392
        %1397 = vst [vmem:[%s380 + $0x18] sm:$0xff] %v1393
        %s1398 = sand.u32 %s269, 1
        %s1399 = scalar_lea.sflag [#allocation3], %s1398
        %s1400 = sand.u32 %s269, 1
        %s1401 = smul.addr %s1400, 32
        %s1402 = scalar_lea.vmem [#allocation2], %s1401
        // Predicated region
        $region65: #{tpu_custom_call.1} parent=63 // pred_check
          %p1403 = pneg %p279
        $region66: #{tpu_custom_call.1} parent=63 // pred_check_branch
          %1405 = sbr.rel (%p1403) target = $region68
        $region67: #{tpu_custom_call.1} parent=63 // pred_region
          %s1406 = smul.u32 4, %s25
          %s1408 = ssub.s32 512, 512
          %1409 = vsyncadd %s1399, %s1408
          %s1410 = smul.addr %s1406, 128
          %s1411 = scalar_lea.hbm %s11, %s1410
          %s1413 = sshll.u32 %s1402, 4
          %s1414 = int_to_ptr.vmem [resolvable:$true] %s1413
          %1416 = dma.vmem_to_hbm [thread:$0]  %s1414, 512, %s1411, %s1399
        $region68: #{tpu_custom_call.1} parent=63 // pred_fallthru
          _
      $region64: #{tpu_custom_call.1} parent=5 // pred_fallthru
        _
      %p1417 = scmp.le.s32.totalorder 2, %s20
      // Predicated region
      $region69: #{tpu_custom_call.1} parent=5 // pred_check
        %p1418 = pneg %p1417
      $region70: #{tpu_custom_call.1} parent=5 // pred_check_branch
        %1420 = sbr.rel (%p1418) target = $region72
      $region71: #{tpu_custom_call.1} parent=5 // pred_region
        %s1421 = ssub.s32 %s20, 2
        // Predicated region
        $region73: #{tpu_custom_call.1} parent=71 // pred_check
          %p1422 = pneg %p285
        $region74: #{tpu_custom_call.1} parent=71 // pred_check_branch
          %1424 = sbr.rel (%p1422) target = $region76
        $region75: #{tpu_custom_call.1} parent=71 // pred_region
          %s1425 = sand.u32 %s270, 1
          %s1426 = scalar_lea.sflag [#allocation3], %s1425
          %s1427 = sand.u32 %s270, 1
          %s1428 = smul.addr %s1427, 32
          %s1429 = scalar_lea.vmem [#allocation2], %s1428
          %1430 = dma.done %s1426, 512
        $region76: #{tpu_custom_call.1} parent=71 // pred_fallthru
          _
      $region72: #{tpu_custom_call.1} parent=5 // pred_fallthru
        _
    $region6: #{tpu_custom_call.1} parent=1 // loop_footer
      %s24 = sadd.s32 1, %s20
    $region7: #{tpu_custom_call.1} parent=1 // loop_footer_branch
      %19 = sbr.rel target = $region3
    $region8: #{tpu_custom_call.1} parent=1 // loop_exit
      _
    %1431 = vsyncpa [#allocation3], 1
    %s1432 = scalar_lea.sflag [#allocation3], 1
    %1433 = vsyncpa %s1432, 1

</llo_original>
